<compile_context>
chip_gen: v6e
topology: v6e:2x2x1
jax: 0.10.0
libtpu: 0.0.40
codegen_flags: <defaults>
</compile_context>

<pallas_src>
import functools

import jax
import jax.numpy as jnp
from jax.experimental import pallas as pl
from jax.experimental.pallas import tpu as pltpu


def _round_up(x, m):
    return (x + m - 1) // m * m


def _pick_tile(size, max_tile, unit):
    """Largest multiple of `unit` that divides `size` and is <= max_tile."""
    best = unit
    t = unit
    while t <= min(max_tile, size):
        if size % t == 0:
            best = t
        t += unit
    return best


# ---------------------------------------------------------------------------
# Pallas kernel: tiled matmul + folded-BN (+ReLU) epilogue
# ---------------------------------------------------------------------------
def _matmul_bn_act_kernel(x_ref, w_ref, s_ref, b_ref, o_ref, acc_ref, *, relu):
    @pl.when(pl.program_id(2) == 0)
    def _():
        acc_ref[...] = jnp.zeros_like(acc_ref)

    # bf16 x bf16 -> f32 accumulate on the MXU.
    acc_ref[...] += jnp.dot(x_ref[...], w_ref[...],
                            preferred_element_type=jnp.float32)

    @pl.when(pl.program_id(2) == pl.num_programs(2) - 1)
    def _():
        y = acc_ref[...] * s_ref[...] + b_ref[...]
        if relu:
            y = jnp.maximum(y, 0.0)
        o_ref[...] = y.astype(o_ref.dtype)


@functools.lru_cache(maxsize=None)
def _build_matmul(Mp, Kp, Np, TM, TN, TK, relu):
    grid = (Mp // TM, Np // TN, Kp // TK)
    return pl.pallas_call(
        functools.partial(_matmul_bn_act_kernel, relu=relu),
        out_shape=jax.ShapeDtypeStruct((Mp, Np), jnp.float32),
        grid_spec=pltpu.PrefetchScalarGridSpec(
            num_scalar_prefetch=0,
            grid=grid,
            in_specs=[
                pl.BlockSpec((TM, TK), lambda i, j, k: (i, k)),   # patches (bf16)
                pl.BlockSpec((TK, TN), lambda i, j, k: (k, j)),   # weights (bf16)
                # scale/bias block index is independent of k, so the pipeline's
                # revisit logic keeps them resident across all K steps.
                pl.BlockSpec((1, TN), lambda i, j, k: (0, j)),
                pl.BlockSpec((1, TN), lambda i, j, k: (0, j)),
            ],
            out_specs=pl.BlockSpec((TM, TN), lambda i, j, k: (i, j)),
            scratch_shapes=[pltpu.VMEM((TM, TN), jnp.float32)],
        ),
        compiler_params=pltpu.CompilerParams(
            dimension_semantics=("parallel", "parallel", "arbitrary")),
    )


# ---------------------------------------------------------------------------
# Conv3x3 + folded BN + ReLU (runs inside the top-level jit)
# ---------------------------------------------------------------------------
def _conv3x3_bn_relu(x, w_pad, scale, bias, cout, relu=True):
    """x: NHWC f32; w_pad: [Kp, Np] bf16 (pre-transposed/padded); scale/bias: [1, Np] f32."""
    n, h, w, cin = x.shape
    Kp, Np = w_pad.shape
    K = 9 * cin
    M = n * h * w

    xp = jnp.pad(x, ((0, 0), (1, 1), (1, 1), (0, 0)))
    # TODO(synk): fold im2col into the kernel itself (tap axis on the K grid
    # with element-offset BlockSpecs) to avoid materializing the patch matrix.
    cols = [xp[:, a:a + h, b:b + w, :] for a in range(3) for b in range(3)]
    pat = jnp.concatenate(cols, axis=-1).reshape(M, K).astype(jnp.bfloat16)

    Mp = _round_up(M, 16)                       # bf16 sublane packing
    TM = _pick_tile(Mp, 512, 16)
    TN = _pick_tile(Np, 512, 128)
    TK = _pick_tile(Kp, 512, 128)
    # Keep at least two parallel output blocks so megacore parts (v7x) can
    # shard the grid across both TensorCores.
    if (Mp // TM) * (Np // TN) == 1:
        if TM % 32 == 0:
            TM //= 2
        elif TN % 256 == 0:
            TN //= 2

    pat = jnp.pad(pat, ((0, Mp - M), (0, Kp - K)))
    out = _build_matmul(Mp, Kp, Np, TM, TN, TK, bool(relu))(
        pat, w_pad, scale, bias)
    return out[:M, :cout].reshape(n, h, w, cout)


# ---------------------------------------------------------------------------
# Parameter construction (weight transform / BN fold / pad / bf16 cast: once)
# ---------------------------------------------------------------------------
def _fold_conv_bn(key, cin, cout):
    w = (jax.random.normal(key, (cout, cin, 3, 3), jnp.float32)
         * jnp.sqrt(2.0 / (cin * 9)))
    conv_b = jnp.zeros((cout,), jnp.float32)
    gamma = jnp.ones((cout,), jnp.float32)
    beta = jnp.zeros((cout,), jnp.float32)
    mean = jnp.zeros((cout,), jnp.float32)
    var = jnp.ones((cout,), jnp.float32)
    inv = gamma / jnp.sqrt(var + 1e-5)
    scale = inv
    bias = (conv_b - mean) * inv + beta

    K, N = 9 * cin, cout
    Kp, Np = _round_up(K, 128), _round_up(N, 128)
    wm = jnp.transpose(w, (2, 3, 1, 0)).reshape(K, N)     # (kh, kw, cin) x cout
    wm = jnp.pad(wm, ((0, Kp - K), (0, Np - N))).astype(jnp.bfloat16)
    s2 = jnp.pad(scale, (0, Np - N)).reshape(1, Np)
    b2 = jnp.pad(bias, (0, Np - N)).reshape(1, Np)
    return {'w': wm, 'scale': s2, 'bias': b2}, w


def make_bridge(in_channels, out_channels, seed=0):
    key = jax.random.PRNGKey(seed)
    k1, k2 = jax.random.split(key)
    l1, w1_raw = _fold_conv_bn(k1, in_channels, out_channels)
    l2, w2_raw = _fold_conv_bn(k2, out_channels, out_channels)
    params = (l1, l2)
    raw_weights = (w1_raw, w2_raw)

    @jax.jit
    def forward(x_nchw, params):
        p1, p2 = params
        x = jnp.transpose(x_nchw, (0, 2, 3, 1)).astype(jnp.float32)  # NCHW->NHWC
        x = _conv3x3_bn_relu(x, p1['w'], p1['scale'], p1['bias'], out_channels)
        x = _conv3x3_bn_relu(x, p2['w'], p2['scale'], p2['bias'], out_channels)
        return jnp.transpose(x, (0, 3, 1, 2))                        # NHWC->NCHW

    return params, raw_weights, forward


# ---------------------------------------------------------------------------
# Pure-JAX reference (f32) for a loose correctness check
# ---------------------------------------------------------------------------
def _reference_bridge(x_nchw, raw_weights):
    x = jnp.transpose(x_nchw, (0, 2, 3, 1)).astype(jnp.float32)
    inv = 1.0 / jnp.sqrt(1.0 + 1e-5)   # folded fresh-BN scale; bias is 0
    for w in raw_weights:
        w_hwio = jnp.transpose(w, (2, 3, 1, 0))
        x = jax.lax.conv_general_dilated(
            x, w_hwio, window_strides=(1, 1), padding='SAME',
            dimension_numbers=('NHWC', 'HWIO', 'NHWC'))
        x = jnp.maximum(x * inv, 0.0)
    return jnp.transpose(x, (0, 3, 1, 2))


if __name__ == "__main__":
    in_channels, out_channels = 32, 32
    params, raw_weights, forward = make_bridge(in_channels, out_channels, seed=0)

    key = jax.random.PRNGKey(0)
    x = jax.random.normal(key, (2, in_channels, 16, 16), jnp.float32)

    out = forward(x, params)
    out = jax.block_until_ready(out)
    assert out.shape == (2, out_channels, 16, 16), out.shape
    assert bool(jnp.all(jnp.isfinite(out)))

    ref = _reference_bridge(x, raw_weights)
    max_err = float(jnp.max(jnp.abs(out - ref)))
    # bf16 operands on the MXU (f32 accumulation): loose tolerance.
    assert max_err < 0.25, f"max abs error vs reference: {max_err}"

    print("KERNEL_OK")
</pallas_src>

<mosaic_0001>
module attributes {stable_mosaic.version = 11 : i64} {
  func.func @_matmul_bn_act_kernel(%arg0: i32, %arg1: i32, %arg2: i32, %arg3: memref<256x384xbf16, #tpu.memory_space<vmem>>, %arg4: memref<384x128xbf16, #tpu.memory_space<vmem>>, %arg5: memref<1x128xf32, #tpu.memory_space<vmem>>, %arg6: memref<1x128xf32, #tpu.memory_space<vmem>>, %arg7: memref<256x128xf32, #tpu.memory_space<vmem>>, %arg8: memref<256x128xf32, #tpu.memory_space<vmem>>) attributes {dimension_semantics = [#tpu.dimension_semantics<parallel>, #tpu.dimension_semantics<parallel>, #tpu.dimension_semantics<arbitrary>], iteration_bounds = array<i64: 2, 1, 1>, scalar_prefetch = 0 : i64, scratch_operands = 1 : i64, tpu.core_type = #tpu.core_type<tc>, window_params = [{transform_indices = @transform_0, window_bounds = array<i64: 256, 384>}, {transform_indices = @transform_1, window_bounds = array<i64: 384, 128>}, {transform_indices = @transform_2, window_bounds = array<i64: 1, 128>}, {transform_indices = @transform_3, window_bounds = array<i64: 1, 128>}, {transform_indices = @transform_4, window_bounds = array<i64: 256, 128>}]} {
    %c0_i32 = arith.constant 0 : i32
    %0 = arith.cmpi eq, %arg2, %c0_i32 : i32
    %1 = arith.extui %0 : i1 to i32
    %c0_i32_0 = arith.constant 0 : i32
    %2 = arith.cmpi ne, %1, %c0_i32_0 : i32
    scf.if %2 {
      %cst_10 = arith.constant 0.000000e+00 : f32
      %12 = vector.broadcast %cst_10 : f32 to vector<256x128xf32>
      %c0_11 = arith.constant 0 : index
      %c0_12 = arith.constant 0 : index
      %13 = vector.load %arg8[%c0_11, %c0_12] : memref<256x128xf32, #tpu.memory_space<vmem>>, vector<256x128xf32>
      tpu.vector_store %arg8[%c0_11, %c0_12], %12 {strides = array<i32>} : memref<256x128xf32, #tpu.memory_space<vmem>>, vector<256x128xf32>,
    } else {
    }
    %c0 = arith.constant 0 : index
    %c0_1 = arith.constant 0 : index
    %3 = vector.load %arg8[%c0, %c0_1] : memref<256x128xf32, #tpu.memory_space<vmem>>, vector<256x128xf32>
    %c0_2 = arith.constant 0 : index
    %c0_3 = arith.constant 0 : index
    %4 = vector.load %arg3[%c0_2, %c0_3] : memref<256x384xbf16, #tpu.memory_space<vmem>>, vector<256x384xbf16>
    %c0_4 = arith.constant 0 : index
    %c0_5 = arith.constant 0 : index
    %5 = vector.load %arg4[%c0_4, %c0_5] : memref<384x128xbf16, #tpu.memory_space<vmem>>, vector<384x128xbf16>
    %cst = arith.constant dense<0.000000e+00> : vector<256x128xf32>
    %6 = tpu.matmul %4, %5, %cst {dimension_numbers = #tpu.dot_dimension_numbers<[1], [0], [0], [1], [0, 0, 1, 1], [], []>} : vector<256x384xbf16>, vector<384x128xbf16>, vector<256x128xf32> -> vector<256x128xf32>
    %7 = arith.addf %3, %6 : vector<256x128xf32>
    %c0_6 = arith.constant 0 : index
    %c0_7 = arith.constant 0 : index
    %8 = vector.load %arg8[%c0_6, %c0_7] : memref<256x128xf32, #tpu.memory_space<vmem>>, vector<256x128xf32>
    tpu.vector_store %arg8[%c0_6, %c0_7], %7 {strides = array<i32>} : memref<256x128xf32, #tpu.memory_space<vmem>>, vector<256x128xf32>,
    %c0_i32_8 = arith.constant 0 : i32
    %9 = arith.cmpi eq, %arg2, %c0_i32_8 : i32
    %10 = arith.extui %9 : i1 to i32
    %c0_i32_9 = arith.constant 0 : i32
    %11 = arith.cmpi ne, %10, %c0_i32_9 : i32
    scf.if %11 {
      %c0_10 = arith.constant 0 : index
      %c0_11 = arith.constant 0 : index
      %12 = vector.load %arg8[%c0_10, %c0_11] : memref<256x128xf32, #tpu.memory_space<vmem>>, vector<256x128xf32>
      %c0_12 = arith.constant 0 : index
      %c0_13 = arith.constant 0 : index
      %13 = vector.load %arg5[%c0_12, %c0_13] : memref<1x128xf32, #tpu.memory_space<vmem>>, vector<1x128xf32>
      %14 = vector.broadcast %13 : vector<1x128xf32> to vector<256x128xf32>
      %15 = arith.mulf %12, %14 : vector<256x128xf32>
      %c0_14 = arith.constant 0 : index
      %c0_15 = arith.constant 0 : index
      %16 = vector.load %arg6[%c0_14, %c0_15] : memref<1x128xf32, #tpu.memory_space<vmem>>, vector<1x128xf32>
      %17 = vector.broadcast %16 : vector<1x128xf32> to vector<256x128xf32>
      %18 = arith.addf %15, %17 : vector<256x128xf32>
      %cst_16 = arith.constant 0.000000e+00 : f32
      %19 = vector.broadcast %cst_16 : f32 to vector<256x128xf32>
      %20 = arith.maximumf %18, %19 : vector<256x128xf32>
      %c0_17 = arith.constant 0 : index
      %c0_18 = arith.constant 0 : index
      %21 = vector.load %arg7[%c0_17, %c0_18] : memref<256x128xf32, #tpu.memory_space<vmem>>, vector<256x128xf32>
      tpu.vector_store %arg7[%c0_17, %c0_18], %20 {strides = array<i32>} : memref<256x128xf32, #tpu.memory_space<vmem>>, vector<256x128xf32>,
    } else {
    }
    return
  }
  func.func @transform_0(%arg0: i32, %arg1: i32, %arg2: i32) -> (i32, i32) {
    %c0_i32 = arith.constant 0 : i32
    return %arg0, %arg2 : i32, i32
  }
  func.func @transform_1(%arg0: i32, %arg1: i32, %arg2: i32) -> (i32, i32) {
    %c0_i32 = arith.constant 0 : i32
    return %arg2, %arg1 : i32, i32
  }
  func.func @transform_2(%arg0: i32, %arg1: i32, %arg2: i32) -> (i32, i32) {
    %c0_i32 = arith.constant 0 : i32
    %c0_i32_0 = arith.constant 0 : i32
    return %c0_i32, %arg1 : i32, i32
  }
  func.func @transform_3(%arg0: i32, %arg1: i32, %arg2: i32) -> (i32, i32) {
    %c0_i32 = arith.constant 0 : i32
    %c0_i32_0 = arith.constant 0 : i32
    return %c0_i32, %arg1 : i32, i32
  }
  func.func @transform_4(%arg0: i32, %arg1: i32, %arg2: i32) -> (i32, i32) {
    %c0_i32 = arith.constant 0 : i32
    return %arg0, %arg1 : i32, i32
  }
}

module attributes {stable_mosaic.version = 11 : i64} {
  func.func @_matmul_bn_act_kernel(%arg0: i32, %arg1: i32, %arg2: i32, %arg3: memref<256x384xbf16, #tpu.memory_space<vmem>>, %arg4: memref<384x128xbf16, #tpu.memory_space<vmem>>, %arg5: memref<1x128xf32, #tpu.memory_space<vmem>>, %arg6: memref<1x128xf32, #tpu.memory_space<vmem>>, %arg7: memref<256x128xf32, #tpu.memory_space<vmem>>, %arg8: memref<256x128xf32, #tpu.memory_space<vmem>>) attributes {dimension_semantics = [#tpu.dimension_semantics<parallel>, #tpu.dimension_semantics<parallel>, #tpu.dimension_semantics<arbitrary>], iteration_bounds = array<i64: 2, 1, 1>, scalar_prefetch = 0 : i64, scratch_operands = 1 : i64, tpu.core_type = #tpu.core_type<tc>, window_params = [{transform_indices = @transform_0, window_bounds = array<i64: 256, 384>}, {transform_indices = @transform_1, window_bounds = array<i64: 384, 128>}, {transform_indices = @transform_2, window_bounds = array<i64: 1, 128>}, {transform_indices = @transform_3, window_bounds = array<i64: 1, 128>}, {transform_indices = @transform_4, window_bounds = array<i64: 256, 128>}]} {
    %c0_i32 = arith.constant 0 : i32
    %0 = arith.cmpi eq, %arg2, %c0_i32 : i32
    %1 = arith.extui %0 : i1 to i32
    %c0_i32_0 = arith.constant 0 : i32
    %2 = arith.cmpi ne, %1, %c0_i32_0 : i32
    scf.if %2 {
      %cst_10 = arith.constant 0.000000e+00 : f32
      %12 = vector.broadcast %cst_10 : f32 to vector<256x128xf32>
      %c0_11 = arith.constant 0 : index
      %c0_12 = arith.constant 0 : index
      %13 = vector.load %arg8[%c0_11, %c0_12] : memref<256x128xf32, #tpu.memory_space<vmem>>, vector<256x128xf32>
      tpu.vector_store %arg8[%c0_11, %c0_12], %12 {strides = array<i32>} : memref<256x128xf32, #tpu.memory_space<vmem>>, vector<256x128xf32>,
    } else {
    }
    %c0 = arith.constant 0 : index
    %c0_1 = arith.constant 0 : index
    %3 = vector.load %arg8[%c0, %c0_1] : memref<256x128xf32, #tpu.memory_space<vmem>>, vector<256x128xf32>
    %c0_2 = arith.constant 0 : index
    %c0_3 = arith.constant 0 : index
    %4 = vector.load %arg3[%c0_2, %c0_3] : memref<256x384xbf16, #tpu.memory_space<vmem>>, vector<256x384xbf16>
    %c0_4 = arith.constant 0 : index
    %c0_5 = arith.constant 0 : index
    %5 = vector.load %arg4[%c0_4, %c0_5] : memref<384x128xbf16, #tpu.memory_space<vmem>>, vector<384x128xbf16>
    %cst = arith.constant dense<0.000000e+00> : vector<256x128xf32>
    %6 = tpu.matmul %4, %5, %cst {dimension_numbers = #tpu.dot_dimension_numbers<[1], [0], [0], [1], [0, 0, 1, 1], [], []>} : vector<256x384xbf16>, vector<384x128xbf16>, vector<256x128xf32> -> vector<256x128xf32>
    %7 = arith.addf %3, %6 : vector<256x128xf32>
    %c0_6 = arith.constant 0 : index
    %c0_7 = arith.constant 0 : index
    %8 = vector.load %arg8[%c0_6, %c0_7] : memref<256x128xf32, #tpu.memory_space<vmem>>, vector<256x128xf32>
    tpu.vector_store %arg8[%c0_6, %c0_7], %7 {strides = array<i32>} : memref<256x128xf32, #tpu.memory_space<vmem>>, vector<256x128xf32>,
    %c0_i32_8 = arith.constant 0 : i32
    %9 = arith.cmpi eq, %arg2, %c0_i32_8 : i32
    %10 = arith.extui %9 : i1 to i32
    %c0_i32_9 = arith.constant 0 : i32
    %11 = arith.cmpi ne, %10, %c0_i32_9 : i32
    scf.if %11 {
      %c0_10 = arith.constant 0 : index
      %c0_11 = arith.constant 0 : index
      %12 = vector.load %arg8[%c0_10, %c0_11] : memref<256x128xf32, #tpu.memory_space<vmem>>, vector<256x128xf32>
      %c0_12 = arith.constant 0 : index
      %c0_13 = arith.constant 0 : index
      %13 = vector.load %arg5[%c0_12, %c0_13] : memref<1x128xf32, #tpu.memory_space<vmem>>, vector<1x128xf32>
      %14 = vector.broadcast %13 : vector<1x128xf32> to vector<256x128xf32>
      %15 = arith.mulf %12, %14 : vector<256x128xf32>
      %c0_14 = arith.constant 0 : index
      %c0_15 = arith.constant 0 : index
      %16 = vector.load %arg6[%c0_14, %c0_15] : memref<1x128xf32, #tpu.memory_space<vmem>>, vector<1x128xf32>
      %17 = vector.broadcast %16 : vector<1x128xf32> to vector<256x128xf32>
      %18 = arith.addf %15, %17 : vector<256x128xf32>
      %cst_16 = arith.constant 0.000000e+00 : f32
      %19 = vector.broadcast %cst_16 : f32 to vector<256x128xf32>
      %20 = arith.maximumf %18, %19 : vector<256x128xf32>
      %c0_17 = arith.constant 0 : index
      %c0_18 = arith.constant 0 : index
      %21 = vector.load %arg7[%c0_17, %c0_18] : memref<256x128xf32, #tpu.memory_space<vmem>>, vector<256x128xf32>
      tpu.vector_store %arg7[%c0_17, %c0_18], %20 {strides = array<i32>} : memref<256x128xf32, #tpu.memory_space<vmem>>, vector<256x128xf32>,
    } else {
    }
    return
  }
  func.func @transform_0(%arg0: i32, %arg1: i32, %arg2: i32) -> (i32, i32) {
    %c0_i32 = arith.constant 0 : i32
    return %arg0, %arg2 : i32, i32
  }
  func.func @transform_1(%arg0: i32, %arg1: i32, %arg2: i32) -> (i32, i32) {
    %c0_i32 = arith.constant 0 : i32
    return %arg2, %arg1 : i32, i32
  }
  func.func @transform_2(%arg0: i32, %arg1: i32, %arg2: i32) -> (i32, i32) {
    %c0_i32 = arith.constant 0 : i32
    %c0_i32_0 = arith.constant 0 : i32
    return %c0_i32, %arg1 : i32, i32
  }
  func.func @transform_3(%arg0: i32, %arg1: i32, %arg2: i32) -> (i32, i32) {
    %c0_i32 = arith.constant 0 : i32
    %c0_i32_0 = arith.constant 0 : i32
    return %c0_i32, %arg1 : i32, i32
  }
  func.func @transform_4(%arg0: i32, %arg1: i32, %arg2: i32) -> (i32, i32) {
    %c0_i32 = arith.constant 0 : i32
    return %arg0, %arg1 : i32, i32
  }
}

</mosaic_0001>

<llo_original>
// kernel: forward.2
$region0: #{forward.2}
  #allocation0 [shape = 'u32[]', space=smem, size = 0x4, offset = 0x4, fixed_abs, tag = 'smem constant byte address 0x4 - core index']
  #allocation1 [shape = 'u32[144,128]{1,0:T(1,128)}', space=vmem, size = 0x12000, scoped, tag = 'internal scratch']
  #allocation2 [shape = 'f32[256,128]{1,0:T(8,128)}', space=vmem, size = 0x20000, scoped, tag = 'scratch operand']
  %s0 = inlined_call_operand.vmem [shape: bf16[512,384], index: 0, kind: input, shape index: {}]
  %s1 = inlined_call_operand.vmem [shape: bf16[384,128], index: 1, kind: input, shape index: {}]
  %s2 = inlined_call_operand.vmem [shape: f32[1,128], index: 2, kind: input, shape index: {}]
  %s3 = inlined_call_operand.vmem [shape: f32[1,128], index: 3, kind: input, shape index: {}]
  %s4 = inlined_call_operand.vmem [shape: f32[512,128], index: 4, kind: output, shape index: {}]
  %s5 = sld [smem:[#allocation0]]
  $region57: #{forward.2} parent=0
    _
  %s7 = ssub.s32 1, %s5
  %s8 = scalar_select 0, %s7, %s5
  loop: start=0, step=1, limit=4
  $region2: #{forward.2} parent=0 // loop_pre_header
    _
  $region3: #{forward.2} parent=0 // loop_header
    %s10 = sphi 0, %s14
    %p11 = scmp.ge.s32.totalorder %s10, 4
    %s17 = sphi 0, %s36
    %s18 = sphi 0, %s32
    %s19 = sphi 0, %s28
    %s20 = sphi 0, %s17
    %s21 = sphi 0, %s18
    %s22 = sphi 0, %s19
    %s23 = sphi 0, %s20
    %s24 = sphi 0, %s21
    %s25 = sphi 0, %s22
    %s41 = sphi 0, %s43
    %s44 = sphi 0, %s41
    %s45 = sphi 0, %s44
    %s61 = sphi 0, %s45
    %s69 = sphi 0, %s71
    %s72 = sphi 0, %s69
    %s73 = sphi 0, %s72
    %s89 = sphi 0, %s73
    %s95 = sphi 0, %s97
    %s98 = sphi 0, %s95
    %s99 = sphi 0, %s98
    %s115 = sphi 0, %s99
    %s121 = sphi 0, %s123
    %s124 = sphi 0, %s121
    %s125 = sphi 0, %s124
    %s141 = sphi 0, %s125
    %s149 = sphi 0, %s151
    %s152 = sphi 0, %s149
    %s153 = sphi 0, %s152
    %s169 = sphi 0, %s153
  $region4: #{forward.2} parent=0 // loop_header_branch
    %13 = sbr.rel (%p11) target = $region8
  $region5: #{forward.2} parent=0 // loop_body
    %s15 = ssub.s32 %s10, 1
    %s16 = ssub.s32 %s10, 2
    %s26 = sadd.s32 1, %s19
    %p27 = scmp.ge.s32.totalorder %s26, 1
    %s28 = scalar_select %p27, 0, %s26
    %s29 = sadd.s32 1, %s18
    %s30 = scalar_select %p27, %s29, %s18
    %p31 = scmp.ge.s32.totalorder %s30, 1
    %s32 = scalar_select %p31, 0, %s30
    %s33 = sadd.s32 1, %s17
    %s34 = scalar_select %p31, %s33, %s17
    %p35 = scmp.ge.s32.totalorder %s34, 2
    %s36 = scalar_select %p35, 0, %s34
    %s37 = ssub.s32 %s17, %s36
    %s38 = ssub.s32 %s19, %s28
    %s39 = sor.u32 %s37, %s38
    %p40 = scmp.eq.s32.totalorder %s39, 0
    %s42 = sadd.s32 %s41, 1
    %s43 = scalar_select %p40, %s41, %s42
    %p46 = pneg %p40
    %p47 = scmp.eq.s32.totalorder %s10, 1
    %p48 = por %p46, %p47
    %p49 = scmp.ne.s32.totalorder %s41, %s44
    %p50 = scmp.eq.s32.totalorder %s10, 0
    %p51 = por %p49, %p50
    %p52 = scmp.ne.s32.totalorder %s41, %s44
    %p53 = scmp.eq.s32.totalorder %s15, 1
    %p54 = por %p52, %p53
    %p55 = scmp.ne.s32.totalorder %s44, %s45
    %p56 = scmp.eq.s32.totalorder %s15, 0
    %p57 = por %p55, %p56
    %p58 = scmp.ne.s32.totalorder %s44, %s45
    %p59 = scmp.eq.s32.totalorder %s16, 1
    %p60 = por %p58, %p59
    %p62 = scmp.ne.s32.totalorder %s45, %s61
    %p63 = scmp.eq.s32.totalorder %s16, 0
    %p64 = por %p62, %p63
    %s65 = ssub.s32 %s19, %s28
    %s66 = ssub.s32 %s18, %s32
    %s67 = sor.u32 %s65, %s66
    %p68 = scmp.eq.s32.totalorder %s67, 0
    %s70 = sadd.s32 %s69, 1
    %s71 = scalar_select %p68, %s69, %s70
    %p74 = pneg %p68
    %p75 = scmp.eq.s32.totalorder %s10, 1
    %p76 = por %p74, %p75
    %p77 = scmp.ne.s32.totalorder %s69, %s72
    %p78 = scmp.eq.s32.totalorder %s10, 0
    %p79 = por %p77, %p78
    %p80 = scmp.ne.s32.totalorder %s69, %s72
    %p81 = scmp.eq.s32.totalorder %s15, 1
    %p82 = por %p80, %p81
    %p83 = scmp.ne.s32.totalorder %s72, %s73
    %p84 = scmp.eq.s32.totalorder %s15, 0
    %p85 = por %p83, %p84
    %p86 = scmp.ne.s32.totalorder %s72, %s73
    %p87 = scmp.eq.s32.totalorder %s16, 1
    %p88 = por %p86, %p87
    %p90 = scmp.ne.s32.totalorder %s73, %s89
    %p91 = scmp.eq.s32.totalorder %s16, 0
    %p92 = por %p90, %p91
    %s93 = ssub.s32 %s18, %s32
    %p94 = scmp.eq.s32.totalorder %s93, 0
    %s96 = sadd.s32 %s95, 1
    %s97 = scalar_select %p94, %s95, %s96
    %p100 = pneg %p94
    %p101 = scmp.eq.s32.totalorder %s10, 1
    %p102 = por %p100, %p101
    %p103 = scmp.ne.s32.totalorder %s95, %s98
    %p104 = scmp.eq.s32.totalorder %s10, 0
    %p105 = por %p103, %p104
    %p106 = scmp.ne.s32.totalorder %s95, %s98
    %p107 = scmp.eq.s32.totalorder %s15, 1
    %p108 = por %p106, %p107
    %p109 = scmp.ne.s32.totalorder %s98, %s99
    %p110 = scmp.eq.s32.totalorder %s15, 0
    %p111 = por %p109, %p110
    %p112 = scmp.ne.s32.totalorder %s98, %s99
    %p113 = scmp.eq.s32.totalorder %s16, 1
    %p114 = por %p112, %p113
    %p116 = scmp.ne.s32.totalorder %s99, %s115
    %p117 = scmp.eq.s32.totalorder %s16, 0
    %p118 = por %p116, %p117
    %s119 = ssub.s32 %s18, %s32
    %p120 = scmp.eq.s32.totalorder %s119, 0
    %s122 = sadd.s32 %s121, 1
    %s123 = scalar_select %p120, %s121, %s122
    %p126 = pneg %p120
    %p127 = scmp.eq.s32.totalorder %s10, 1
    %p128 = por %p126, %p127
    %p129 = scmp.ne.s32.totalorder %s121, %s124
    %p130 = scmp.eq.s32.totalorder %s10, 0
    %p131 = por %p129, %p130
    %p132 = scmp.ne.s32.totalorder %s121, %s124
    %p133 = scmp.eq.s32.totalorder %s15, 1
    %p134 = por %p132, %p133
    %p135 = scmp.ne.s32.totalorder %s124, %s125
    %p136 = scmp.eq.s32.totalorder %s15, 0
    %p137 = por %p135, %p136
    %p138 = scmp.ne.s32.totalorder %s124, %s125
    %p139 = scmp.eq.s32.totalorder %s16, 1
    %p140 = por %p138, %p139
    %p142 = scmp.ne.s32.totalorder %s125, %s141
    %p143 = scmp.eq.s32.totalorder %s16, 0
    %p144 = por %p142, %p143
    %s145 = ssub.s32 %s17, %s36
    %s146 = ssub.s32 %s18, %s32
    %s147 = sor.u32 %s145, %s146
    %p148 = scmp.eq.s32.totalorder %s147, 0
    %s150 = sadd.s32 %s149, 1
    %s151 = scalar_select %p148, %s149, %s150
    %p154 = pneg %p148
    %p155 = scmp.eq.s32.totalorder %s10, 1
    %p156 = por %p154, %p155
    %p157 = scmp.ne.s32.totalorder %s149, %s152
    %p158 = scmp.eq.s32.totalorder %s10, 0
    %p159 = por %p157, %p158
    %p160 = scmp.ne.s32.totalorder %s149, %s152
    %p161 = scmp.eq.s32.totalorder %s15, 1
    %p162 = por %p160, %p161
    %p163 = scmp.ne.s32.totalorder %s152, %s153
    %p164 = scmp.eq.s32.totalorder %s15, 0
    %p165 = por %p163, %p164
    %p166 = scmp.ne.s32.totalorder %s152, %s153
    %p167 = scmp.eq.s32.totalorder %s16, 1
    %p168 = por %p166, %p167
    %p170 = scmp.ne.s32.totalorder %s153, %s169
    %p171 = scmp.eq.s32.totalorder %s16, 0
    %p172 = por %p170, %p171
    %p173 = scmp.le.s32.totalorder 1, %s10
    %p174 = scmp.lt.s32.totalorder %s10, 3
    %p175 = pnand %p173, %p174
    %p176 = pneg %p175
    // Predicated region
    $region9: #{forward.2} parent=5 // pred_check
      _
    $region10: #{forward.2} parent=5 // pred_check_branch
      %178 = sbr.rel (%p175) target = $region12
    $region11: #{forward.2} parent=5 // pred_region
      %s179 = ssub.s32 %s10, 1
      // Predicated region
      $region13: #{forward.2} parent=11 // pred_check
        %p180 = pneg %p85
      $region14: #{forward.2} parent=11 // pred_check_branch
        %182 = sbr.rel (%p180) target = $region16
      $region15: #{forward.2} parent=11 // pred_region
        %s183 = smul.u32 48, %s22
        %p184 = scmp.lt.s32.totalorder %s183, 47
        %s185 = scalar_select %p184, %s183, 47
        %p186 = scmp.lt.s32.totalorder %s21, 0
        %s187 = scalar_select %p186, %s21, 0
        %s188 = sadd.s32 %s187, %s185
        %s189 = smul.addr %s188, 4
        %s190 = scalar_lea.vmem %s1, %s189
        %s191 = smul.u32 48, %s22
      $region16: #{forward.2} parent=11 // pred_fallthru
        _
      // Predicated region
      $region17: #{forward.2} parent=11 // pred_check
        %p192 = pneg %p111
      $region18: #{forward.2} parent=11 // pred_check_branch
        %194 = sbr.rel (%p192) target = $region20
      $region19: #{forward.2} parent=11 // pred_region
        %p195 = scmp.lt.s32.totalorder %s21, 0
        %s196 = scalar_select %p195, %s21, 0
        %s197 = scalar_lea.vmem %s2, %s196
      $region20: #{forward.2} parent=11 // pred_fallthru
        _
      // Predicated region
      $region21: #{forward.2} parent=11 // pred_check
        %p198 = pneg %p137
      $region22: #{forward.2} parent=11 // pred_check_branch
        %200 = sbr.rel (%p198) target = $region24
      $region23: #{forward.2} parent=11 // pred_region
        %p201 = scmp.lt.s32.totalorder %s21, 0
        %s202 = scalar_select %p201, %s21, 0
        %s203 = scalar_lea.vmem %s3, %s202
      $region24: #{forward.2} parent=11 // pred_fallthru
        _
    $region12: #{forward.2} parent=5 // pred_fallthru
      _
    %p204 = scmp.lt.s32.totalorder %s10, 2
    // Predicated region
    $region25: #{forward.2} parent=5 // pred_check
      %p205 = pneg %p204
    $region26: #{forward.2} parent=5 // pred_check_branch
      %207 = sbr.rel (%p205) target = $region28
    $region27: #{forward.2} parent=5 // pred_region
      // Predicated region
      $region29: #{forward.2} parent=27 // pred_check
        %p208 = pneg %p51
      $region30: #{forward.2} parent=27 // pred_check_branch
        %210 = sbr.rel (%p208) target = $region32
      $region31: #{forward.2} parent=27 // pred_region
        %s211 = smul.u32 32, %s17
        %s212 = smul.u32 3, %s19
        %p213 = scmp.lt.s32.totalorder %s211, 63
        %s214 = scalar_select %p213, %s211, 63
        %p215 = scmp.lt.s32.totalorder %s212, 2
        %s216 = scalar_select %p215, %s212, 2
        %s217 = smul.addr %s214, 3
        %s218 = sadd.s32 %s216, %s217
        %s219 = smul.addr %s218, 4
        %s220 = scalar_lea.vmem %s0, %s219
        %s221 = smul.u32 32, %s17
        %s222 = smul.u32 3, %s19
      $region32: #{forward.2} parent=27 // pred_fallthru
        _
    $region28: #{forward.2} parent=5 // pred_fallthru
      _
    %p223 = scmp.le.s32.totalorder 1, %s10
    %p224 = scmp.lt.s32.totalorder %s10, 3
    %p225 = pnand %p223, %p224
    %p226 = pneg %p225
    // Predicated region
    $region33: #{forward.2} parent=5 // pred_check
      _
    $region34: #{forward.2} parent=5 // pred_check_branch
      %228 = sbr.rel (%p225) target = $region36
    $region35: #{forward.2} parent=5 // pred_region
      %s229 = ssub.s32 %s10, 1
      %s230 = smul.u32 32, %s20
      %s231 = smul.u32 3, %s22
      %p232 = scmp.lt.s32.totalorder %s230, 63
      %s233 = scalar_select %p232, %s230, 63
      %p234 = scmp.lt.s32.totalorder %s231, 2
      %s235 = scalar_select %p234, %s231, 2
      %s236 = smul.addr %s233, 3
      %s237 = sadd.s32 %s235, %s236
      %s238 = smul.addr %s237, 4
      %s239 = scalar_lea.vmem %s0, %s238
      %p240 = pneg %p57
      %p241 = pneg %p54
      %s242 = smul.u32 48, %s22
      %p243 = scmp.lt.s32.totalorder %s242, 47
      %s244 = scalar_select %p243, %s242, 47
      %p245 = scmp.lt.s32.totalorder %s21, 0
      %s246 = scalar_select %p245, %s21, 0
      %s247 = sadd.s32 %s246, %s244
      %s248 = smul.addr %s247, 4
      %s249 = scalar_lea.vmem %s1, %s248
      %p250 = pneg %p85
      %p251 = pneg %p82
      %p252 = scmp.lt.s32.totalorder %s21, 0
      %s253 = scalar_select %p252, %s21, 0
      %s254 = scalar_lea.vmem %s2, %s253
      %p255 = pneg %p111
      %p256 = pneg %p108
      %p257 = scmp.lt.s32.totalorder %s21, 0
      %s258 = scalar_select %p257, %s21, 0
      %s259 = scalar_lea.vmem %s3, %s258
      %p260 = pneg %p137
      %p261 = pneg %p134
      %p262 = pneg %p165
      %p263 = pneg %p162
      %s264 = smul.u32 32, %s20
      %p265 = scmp.lt.s32.totalorder %s264, 63
      %s266 = scalar_select %p265, %s264, 63
      %p267 = scmp.lt.s32.totalorder %s21, 0
      %s268 = scalar_select %p267, %s21, 0
      %s269 = sadd.s32 %s268, %s266
      %s270 = smul.addr %s269, 8
      %s271 = scalar_lea.vmem %s4, %s270
      %s272 = smul.u32 32, %s20
      %s273 = smul.u32 3, %s22
      %p274 = scmp.lt.s32.totalorder %s272, 63
      %s275 = scalar_select %p274, %s272, 63
      %p276 = scmp.lt.s32.totalorder %s273, 2
      %s277 = scalar_select %p276, %s273, 2
      %s278 = smul.addr %s275, 3
      %s279 = sadd.s32 %s277, %s278
      %s280 = smul.addr %s279, 4
      %s281 = scalar_lea.vmem %s0, %s280
      %s282 = smul.u32 32, %s20
      %s283 = smul.u32 3, %s22
      %s284 = smul.u32 48, %s22
      %p285 = scmp.lt.s32.totalorder %s284, 47
      %s286 = scalar_select %p285, %s284, 47
      %p287 = scmp.lt.s32.totalorder %s21, 0
      %s288 = scalar_select %p287, %s21, 0
      %s289 = sadd.s32 %s288, %s286
      %s290 = smul.addr %s289, 4
      %s291 = scalar_lea.vmem %s1, %s290
      %s292 = smul.u32 48, %s22
      %p293 = scmp.lt.s32.totalorder %s21, 0
      %s294 = scalar_select %p293, %s21, 0
      %s295 = scalar_lea.vmem %s2, %s294
      %p296 = scmp.lt.s32.totalorder %s21, 0
      %s297 = scalar_select %p296, %s21, 0
      %s298 = scalar_lea.vmem %s3, %s297
      %s299 = smul.u32 32, %s20
      %p300 = scmp.lt.s32.totalorder %s299, 63
      %s301 = scalar_select %p300, %s299, 63
      %p302 = scmp.lt.s32.totalorder %s21, 0
      %s303 = scalar_select %p302, %s21, 0
      %s304 = sadd.s32 %s303, %s301
      %s305 = smul.addr %s304, 8
      %s306 = scalar_lea.vmem %s4, %s305
      %s307 = smul.u32 32, %s20
      %p309 = scmp.eq.s32.totalorder %s22, 0
      // Predicated region
      $region37: #{forward.2} parent=35 // pred_check
        %p310 = pneg %p309
      $region38: #{forward.2} parent=35 // pred_check_branch
        %312 = sbr.rel (%p310) target = $region40
      $region39: #{forward.2} parent=35 // pred_region
        %313 = vst [vmem:[#allocation2] sm:$0xff] 0.0
        %314 = vst [vmem:[#allocation2 + $0x8] sm:$0xff] 0.0
        %315 = vst [vmem:[#allocation2 + $0x10] sm:$0xff] 0.0
        %316 = vst [vmem:[#allocation2 + $0x18] sm:$0xff] 0.0
        %317 = vst [vmem:[#allocation2 + $0x20] sm:$0xff] 0.0
        %318 = vst [vmem:[#allocation2 + $0x28] sm:$0xff] 0.0
        %319 = vst [vmem:[#allocation2 + $0x30] sm:$0xff] 0.0
        %320 = vst [vmem:[#allocation2 + $0x38] sm:$0xff] 0.0
        %321 = vst [vmem:[#allocation2 + $0x40] sm:$0xff] 0.0
        %322 = vst [vmem:[#allocation2 + $0x48] sm:$0xff] 0.0
        %323 = vst [vmem:[#allocation2 + $0x50] sm:$0xff] 0.0
        %324 = vst [vmem:[#allocation2 + $0x58] sm:$0xff] 0.0
        %325 = vst [vmem:[#allocation2 + $0x60] sm:$0xff] 0.0
        %326 = vst [vmem:[#allocation2 + $0x68] sm:$0xff] 0.0
        %327 = vst [vmem:[#allocation2 + $0x70] sm:$0xff] 0.0
        %328 = vst [vmem:[#allocation2 + $0x78] sm:$0xff] 0.0
        %329 = vst [vmem:[#allocation2 + $0x80] sm:$0xff] 0.0
        %330 = vst [vmem:[#allocation2 + $0x88] sm:$0xff] 0.0
        %331 = vst [vmem:[#allocation2 + $0x90] sm:$0xff] 0.0
        %332 = vst [vmem:[#allocation2 + $0x98] sm:$0xff] 0.0
        %333 = vst [vmem:[#allocation2 + $0xa0] sm:$0xff] 0.0
        %334 = vst [vmem:[#allocation2 + $0xa8] sm:$0xff] 0.0
        %335 = vst [vmem:[#allocation2 + $0xb0] sm:$0xff] 0.0
        %336 = vst [vmem:[#allocation2 + $0xb8] sm:$0xff] 0.0
        %337 = vst [vmem:[#allocation2 + $0xc0] sm:$0xff] 0.0
        %338 = vst [vmem:[#allocation2 + $0xc8] sm:$0xff] 0.0
        %339 = vst [vmem:[#allocation2 + $0xd0] sm:$0xff] 0.0
        %340 = vst [vmem:[#allocation2 + $0xd8] sm:$0xff] 0.0
        %341 = vst [vmem:[#allocation2 + $0xe0] sm:$0xff] 0.0
        %342 = vst [vmem:[#allocation2 + $0xe8] sm:$0xff] 0.0
        %343 = vst [vmem:[#allocation2 + $0xf0] sm:$0xff] 0.0
        %344 = vst [vmem:[#allocation2 + $0xf8] sm:$0xff] 0.0
      $region40: #{forward.2} parent=35 // pred_fallthru
        _
      %v345 = vld [vmem:[#allocation2] sm:$0xff]
      %v346 = vld [vmem:[#allocation2 + $0x8] sm:$0xff]
      %v347 = vld [vmem:[#allocation2 + $0x10] sm:$0xff]
      %v348 = vld [vmem:[#allocation2 + $0x18] sm:$0xff]
      %v349 = vld [vmem:[#allocation2 + $0x20] sm:$0xff]
      %v350 = vld [vmem:[#allocation2 + $0x28] sm:$0xff]
      %v351 = vld [vmem:[#allocation2 + $0x30] sm:$0xff]
      %v352 = vld [vmem:[#allocation2 + $0x38] sm:$0xff]
      %v353 = vld [vmem:[#allocation2 + $0x40] sm:$0xff]
      %v354 = vld [vmem:[#allocation2 + $0x48] sm:$0xff]
      %v355 = vld [vmem:[#allocation2 + $0x50] sm:$0xff]
      %v356 = vld [vmem:[#allocation2 + $0x58] sm:$0xff]
      %v357 = vld [vmem:[#allocation2 + $0x60] sm:$0xff]
      %v358 = vld [vmem:[#allocation2 + $0x68] sm:$0xff]
      %v359 = vld [vmem:[#allocation2 + $0x70] sm:$0xff]
      %v360 = vld [vmem:[#allocation2 + $0x78] sm:$0xff]
      %v361 = vld [vmem:[#allocation2 + $0x80] sm:$0xff]
      %v362 = vld [vmem:[#allocation2 + $0x88] sm:$0xff]
      %v363 = vld [vmem:[#allocation2 + $0x90] sm:$0xff]
      %v364 = vld [vmem:[#allocation2 + $0x98] sm:$0xff]
      %v365 = vld [vmem:[#allocation2 + $0xa0] sm:$0xff]
      %v366 = vld [vmem:[#allocation2 + $0xa8] sm:$0xff]
      %v367 = vld [vmem:[#allocation2 + $0xb0] sm:$0xff]
      %v368 = vld [vmem:[#allocation2 + $0xb8] sm:$0xff]
      %v369 = vld [vmem:[#allocation2 + $0xc0] sm:$0xff]
      %v370 = vld [vmem:[#allocation2 + $0xc8] sm:$0xff]
      %v371 = vld [vmem:[#allocation2 + $0xd0] sm:$0xff]
      %v372 = vld [vmem:[#allocation2 + $0xd8] sm:$0xff]
      %v373 = vld [vmem:[#allocation2 + $0xe0] sm:$0xff]
      %v374 = vld [vmem:[#allocation2 + $0xe8] sm:$0xff]
      %v375 = vld [vmem:[#allocation2 + $0xf0] sm:$0xff]
      %v376 = vld [vmem:[#allocation2 + $0xf8] sm:$0xff]
      %v377 = vld [vmem:[%s281] sm:$0xff]
      %v378 = vld [vmem:[%s281 + $0x8] sm:$0xf]
      %v379 = vld [vmem:[%s281 + $0xc] sm:$0xff]
      %v380 = vld [vmem:[%s281 + $0x14] sm:$0xf]
      %v381 = vld [vmem:[%s281 + $0x18] sm:$0xff]
      %v382 = vld [vmem:[%s281 + $0x20] sm:$0xf]
      %v383 = vld [vmem:[%s281 + $0x24] sm:$0xff]
      %v384 = vld [vmem:[%s281 + $0x2c] sm:$0xf]
      %v385 = vld [vmem:[%s281 + $0x30] sm:$0xff]
      %v386 = vld [vmem:[%s281 + $0x38] sm:$0xf]
      %v387 = vld [vmem:[%s281 + $0x3c] sm:$0xff]
      %v388 = vld [vmem:[%s281 + $0x44] sm:$0xf]
      %v389 = vld [vmem:[%s281 + $0x48] sm:$0xff]
      %v390 = vld [vmem:[%s281 + $0x50] sm:$0xf]
      %v391 = vld [vmem:[%s281 + $0x54] sm:$0xff]
      %v392 = vld [vmem:[%s281 + $0x5c] sm:$0xf]
      %v393 = vld [vmem:[%s281 + $0x60] sm:$0xff]
      %v394 = vld [vmem:[%s281 + $0x68] sm:$0xf]
      %v395 = vld [vmem:[%s281 + $0x6c] sm:$0xff]
      %v396 = vld [vmem:[%s281 + $0x74] sm:$0xf]
      %v397 = vld [vmem:[%s281 + $0x78] sm:$0xff]
      %v398 = vld [vmem:[%s281 + $0x80] sm:$0xf]
      %v399 = vld [vmem:[%s281 + $0x84] sm:$0xff]
      %v400 = vld [vmem:[%s281 + $0x8c] sm:$0xf]
      %v401 = vld [vmem:[%s281 + $0x90] sm:$0xff]
      %v402 = vld [vmem:[%s281 + $0x98] sm:$0xf]
      %v403 = vld [vmem:[%s281 + $0x9c] sm:$0xff]
      %v404 = vld [vmem:[%s281 + $0xa4] sm:$0xf]
      %v405 = vld [vmem:[%s281 + $0xa8] sm:$0xff]
      %v406 = vld [vmem:[%s281 + $0xb0] sm:$0xf]
      %v407 = vld [vmem:[%s281 + $0xb4] sm:$0xff]
      %v408 = vld [vmem:[%s281 + $0xbc] sm:$0xf]
      %v409 = vld [vmem:[%s281 + $0xc0] sm:$0xff]
      %v410 = vld [vmem:[%s281 + $0xc8] sm:$0xf]
      %v411 = vld [vmem:[%s281 + $0xcc] sm:$0xff]
      %v412 = vld [vmem:[%s281 + $0xd4] sm:$0xf]
      %v413 = vld [vmem:[%s281 + $0xd8] sm:$0xff]
      %v414 = vld [vmem:[%s281 + $0xe0] sm:$0xf]
      %v415 = vld [vmem:[%s281 + $0xe4] sm:$0xff]
      %v416 = vld [vmem:[%s281 + $0xec] sm:$0xf]
      %v417 = vld [vmem:[%s281 + $0xf0] sm:$0xff]
      %v418 = vld [vmem:[%s281 + $0xf8] sm:$0xf]
      %v419 = vld [vmem:[%s281 + $0xfc] sm:$0xff]
      %v420 = vld [vmem:[%s281 + $0x104] sm:$0xf]
      %v421 = vld [vmem:[%s281 + $0x108] sm:$0xff]
      %v422 = vld [vmem:[%s281 + $0x110] sm:$0xf]
      %v423 = vld [vmem:[%s281 + $0x114] sm:$0xff]
      %v424 = vld [vmem:[%s281 + $0x11c] sm:$0xf]
      %v425 = vld [vmem:[%s281 + $0x120] sm:$0xff]
      %v426 = vld [vmem:[%s281 + $0x128] sm:$0xf]
      %v427 = vld [vmem:[%s281 + $0x12c] sm:$0xff]
      %v428 = vld [vmem:[%s281 + $0x134] sm:$0xf]
      %v429 = vld [vmem:[%s281 + $0x138] sm:$0xff]
      %v430 = vld [vmem:[%s281 + $0x140] sm:$0xf]
      %v431 = vld [vmem:[%s281 + $0x144] sm:$0xff]
      %v432 = vld [vmem:[%s281 + $0x14c] sm:$0xf]
      %v433 = vld [vmem:[%s281 + $0x150] sm:$0xff]
      %v434 = vld [vmem:[%s281 + $0x158] sm:$0xf]
      %v435 = vld [vmem:[%s281 + $0x15c] sm:$0xff]
      %v436 = vld [vmem:[%s281 + $0x164] sm:$0xf]
      %v437 = vld [vmem:[%s281 + $0x168] sm:$0xff]
      %v438 = vld [vmem:[%s281 + $0x170] sm:$0xf]
      %v439 = vld [vmem:[%s281 + $0x174] sm:$0xff]
      %v440 = vld [vmem:[%s281 + $0x17c] sm:$0xf]
      %v441 = vld [vmem:[%s291] sm:$0xf]
      %v442 = vld [vmem:[%s291 + $0x4] sm:$0xf]
      %v443 = vld [vmem:[%s291 + $0x8] sm:$0xf]
      %v444 = vld [vmem:[%s291 + $0xc] sm:$0xf]
      %v445 = vld [vmem:[%s291 + $0x10] sm:$0xf]
      %v446 = vld [vmem:[%s291 + $0x14] sm:$0xf]
      %v447 = vld [vmem:[%s291 + $0x18] sm:$0xf]
      %v448 = vld [vmem:[%s291 + $0x1c] sm:$0xf]
      %v449 = vld [vmem:[%s291 + $0x20] sm:$0xf]
      %v450 = vld [vmem:[%s291 + $0x24] sm:$0xf]
      %v451 = vld [vmem:[%s291 + $0x28] sm:$0xf]
      %v452 = vld [vmem:[%s291 + $0x2c] sm:$0xf]
      %v453 = vld [vmem:[%s291 + $0x30] sm:$0xf]
      %v454 = vld [vmem:[%s291 + $0x34] sm:$0xf]
      %v455 = vld [vmem:[%s291 + $0x38] sm:$0xf]
      %v456 = vld [vmem:[%s291 + $0x3c] sm:$0xf]
      %v457 = vld [vmem:[%s291 + $0x40] sm:$0xf]
      %v458 = vld [vmem:[%s291 + $0x44] sm:$0xf]
      %v459 = vld [vmem:[%s291 + $0x48] sm:$0xf]
      %v460 = vld [vmem:[%s291 + $0x4c] sm:$0xf]
      %v461 = vld [vmem:[%s291 + $0x50] sm:$0xf]
      %v462 = vld [vmem:[%s291 + $0x54] sm:$0xf]
      %v463 = vld [vmem:[%s291 + $0x58] sm:$0xf]
      %v464 = vld [vmem:[%s291 + $0x5c] sm:$0xf]
      %v465 = vld [vmem:[%s291 + $0x60] sm:$0xf]
      %v466 = vld [vmem:[%s291 + $0x64] sm:$0xf]
      %v467 = vld [vmem:[%s291 + $0x68] sm:$0xf]
      %v468 = vld [vmem:[%s291 + $0x6c] sm:$0xf]
      %v469 = vld [vmem:[%s291 + $0x70] sm:$0xf]
      %v470 = vld [vmem:[%s291 + $0x74] sm:$0xf]
      %v471 = vld [vmem:[%s291 + $0x78] sm:$0xf]
      %v472 = vld [vmem:[%s291 + $0x7c] sm:$0xf]
      %v473 = vld [vmem:[%s291 + $0x80] sm:$0xf]
      %v474 = vld [vmem:[%s291 + $0x84] sm:$0xf]
      %v475 = vld [vmem:[%s291 + $0x88] sm:$0xf]
      %v476 = vld [vmem:[%s291 + $0x8c] sm:$0xf]
      %v477 = vld [vmem:[%s291 + $0x90] sm:$0xf]
      %v478 = vld [vmem:[%s291 + $0x94] sm:$0xf]
      %v479 = vld [vmem:[%s291 + $0x98] sm:$0xf]
      %v480 = vld [vmem:[%s291 + $0x9c] sm:$0xf]
      %v481 = vld [vmem:[%s291 + $0xa0] sm:$0xf]
      %v482 = vld [vmem:[%s291 + $0xa4] sm:$0xf]
      %v483 = vld [vmem:[%s291 + $0xa8] sm:$0xf]
      %v484 = vld [vmem:[%s291 + $0xac] sm:$0xf]
      %v485 = vld [vmem:[%s291 + $0xb0] sm:$0xf]
      %v486 = vld [vmem:[%s291 + $0xb4] sm:$0xf]
      %v487 = vld [vmem:[%s291 + $0xb8] sm:$0xf]
      %v488 = vld [vmem:[%s291 + $0xbc] sm:$0xf]
      %v553 = vunpack.c.l.b16 %v377
      %v554 = vunpack.c.h.b16 %v377
      %v555 = vunpack.c.l.b16 %v378
      %v556 = vunpack.c.l.b16 %v379
      %v557 = vunpack.c.h.b16 %v379
      %v558 = vunpack.c.l.b16 %v380
      %v559 = vunpack.c.l.b16 %v381
      %v560 = vunpack.c.h.b16 %v381
      %v561 = vunpack.c.l.b16 %v382
      %v562 = vunpack.c.l.b16 %v383
      %v563 = vunpack.c.h.b16 %v383
      %v564 = vunpack.c.l.b16 %v384
      %v565 = vunpack.c.l.b16 %v385
      %v566 = vunpack.c.h.b16 %v385
      %v567 = vunpack.c.l.b16 %v386
      %v568 = vunpack.c.l.b16 %v387
      %v569 = vunpack.c.h.b16 %v387
      %v570 = vunpack.c.l.b16 %v388
      %v571 = vunpack.c.l.b16 %v389
      %v572 = vunpack.c.h.b16 %v389
      %v573 = vunpack.c.l.b16 %v390
      %v574 = vunpack.c.l.b16 %v391
      %v575 = vunpack.c.h.b16 %v391
      %v576 = vunpack.c.l.b16 %v392
      %v577 = vunpack.c.l.b16 %v393
      %v578 = vunpack.c.h.b16 %v393
      %v579 = vunpack.c.l.b16 %v394
      %v580 = vunpack.c.l.b16 %v395
      %v581 = vunpack.c.h.b16 %v395
      %v582 = vunpack.c.l.b16 %v396
      %v583 = vunpack.c.l.b16 %v397
      %v584 = vunpack.c.h.b16 %v397
      %v585 = vunpack.c.l.b16 %v398
      %v586 = vunpack.c.l.b16 %v399
      %v587 = vunpack.c.h.b16 %v399
      %v588 = vunpack.c.l.b16 %v400
      %v589 = vunpack.c.l.b16 %v401
      %v590 = vunpack.c.h.b16 %v401
      %v591 = vunpack.c.l.b16 %v402
      %v592 = vunpack.c.l.b16 %v403
      %v593 = vunpack.c.h.b16 %v403
      %v594 = vunpack.c.l.b16 %v404
      %v595 = vunpack.c.l.b16 %v405
      %v596 = vunpack.c.h.b16 %v405
      %v597 = vunpack.c.l.b16 %v406
      %v598 = vunpack.c.l.b16 %v407
      %v599 = vunpack.c.h.b16 %v407
      %v600 = vunpack.c.l.b16 %v408
      %v601 = vunpack.c.l.b16 %v409
      %v602 = vunpack.c.h.b16 %v409
      %v603 = vunpack.c.l.b16 %v410
      %v604 = vunpack.c.l.b16 %v411
      %v605 = vunpack.c.h.b16 %v411
      %v606 = vunpack.c.l.b16 %v412
      %v607 = vunpack.c.l.b16 %v413
      %v608 = vunpack.c.h.b16 %v413
      %v609 = vunpack.c.l.b16 %v414
      %v610 = vunpack.c.l.b16 %v415
      %v611 = vunpack.c.h.b16 %v415
      %v612 = vunpack.c.l.b16 %v416
      %v613 = vunpack.c.l.b16 %v417
      %v614 = vunpack.c.h.b16 %v417
      %v615 = vunpack.c.l.b16 %v418
      %v616 = vunpack.c.l.b16 %v419
      %v617 = vunpack.c.h.b16 %v419
      %v618 = vunpack.c.l.b16 %v420
      %v619 = vunpack.c.l.b16 %v421
      %v620 = vunpack.c.h.b16 %v421
      %v621 = vunpack.c.l.b16 %v422
      %v622 = vunpack.c.l.b16 %v423
      %v623 = vunpack.c.h.b16 %v423
      %v624 = vunpack.c.l.b16 %v424
      %v625 = vunpack.c.l.b16 %v425
      %v626 = vunpack.c.h.b16 %v425
      %v627 = vunpack.c.l.b16 %v426
      %v628 = vunpack.c.l.b16 %v427
      %v629 = vunpack.c.h.b16 %v427
      %v630 = vunpack.c.l.b16 %v428
      %v631 = vunpack.c.l.b16 %v429
      %v632 = vunpack.c.h.b16 %v429
      %v633 = vunpack.c.l.b16 %v430
      %v634 = vunpack.c.l.b16 %v431
      %v635 = vunpack.c.h.b16 %v431
      %v636 = vunpack.c.l.b16 %v432
      %v637 = vunpack.c.l.b16 %v433
      %v638 = vunpack.c.h.b16 %v433
      %v639 = vunpack.c.l.b16 %v434
      %v640 = vunpack.c.l.b16 %v435
      %v641 = vunpack.c.h.b16 %v435
      %v642 = vunpack.c.l.b16 %v436
      %v643 = vunpack.c.l.b16 %v437
      %v644 = vunpack.c.h.b16 %v437
      %v645 = vunpack.c.l.b16 %v438
      %v646 = vunpack.c.l.b16 %v439
      %v647 = vunpack.c.h.b16 %v439
      %v648 = vunpack.c.l.b16 %v440
      %v649 = vpack.c.b16 %v556, %v553
      %v650 = vpack.c.b16 %v557, %v554
      %v651 = vpack.c.b16 %v558, %v555
      %v652 = vpack.c.b16 %v562, %v559
      %v653 = vpack.c.b16 %v563, %v560
      %v654 = vpack.c.b16 %v564, %v561
      %v655 = vpack.c.b16 %v568, %v565
      %v656 = vpack.c.b16 %v569, %v566
      %v657 = vpack.c.b16 %v570, %v567
      %v658 = vpack.c.b16 %v574, %v571
      %v659 = vpack.c.b16 %v575, %v572
      %v660 = vpack.c.b16 %v576, %v573
      %v661 = vpack.c.b16 %v580, %v577
      %v662 = vpack.c.b16 %v581, %v578
      %v663 = vpack.c.b16 %v582, %v579
      %v664 = vpack.c.b16 %v586, %v583
      %v665 = vpack.c.b16 %v587, %v584
      %v666 = vpack.c.b16 %v588, %v585
      %v667 = vpack.c.b16 %v592, %v589
      %v668 = vpack.c.b16 %v593, %v590
      %v669 = vpack.c.b16 %v594, %v591
      %v670 = vpack.c.b16 %v598, %v595
      %v671 = vpack.c.b16 %v599, %v596
      %v672 = vpack.c.b16 %v600, %v597
      %v673 = vpack.c.b16 %v604, %v601
      %v674 = vpack.c.b16 %v605, %v602
      %v675 = vpack.c.b16 %v606, %v603
      %v676 = vpack.c.b16 %v610, %v607
      %v677 = vpack.c.b16 %v611, %v608
      %v678 = vpack.c.b16 %v612, %v609
      %v679 = vpack.c.b16 %v616, %v613
      %v680 = vpack.c.b16 %v617, %v614
      %v681 = vpack.c.b16 %v618, %v615
      %v682 = vpack.c.b16 %v622, %v619
      %v683 = vpack.c.b16 %v623, %v620
      %v684 = vpack.c.b16 %v624, %v621
      %v685 = vpack.c.b16 %v628, %v625
      %v686 = vpack.c.b16 %v629, %v626
      %v687 = vpack.c.b16 %v630, %v627
      %v688 = vpack.c.b16 %v634, %v631
      %v689 = vpack.c.b16 %v635, %v632
      %v690 = vpack.c.b16 %v636, %v633
      %v691 = vpack.c.b16 %v640, %v637
      %v692 = vpack.c.b16 %v641, %v638
      %v693 = vpack.c.b16 %v642, %v639
      %v694 = vpack.c.b16 %v646, %v643
      %v695 = vpack.c.b16 %v647, %v644
      %v696 = vpack.c.b16 %v648, %v645
      %v793 = vunpack.c.l.b16 %v441
      %v794 = vunpack.c.l.b16 %v442
      %v795 = vunpack.c.l.b16 %v443
      %v796 = vunpack.c.l.b16 %v444
      %v797 = vunpack.c.l.b16 %v445
      %v798 = vunpack.c.l.b16 %v446
      %v799 = vunpack.c.l.b16 %v447
      %v800 = vunpack.c.l.b16 %v448
      %v801 = vunpack.c.l.b16 %v449
      %v802 = vunpack.c.l.b16 %v450
      %v803 = vunpack.c.l.b16 %v451
      %v804 = vunpack.c.l.b16 %v452
      %v805 = vunpack.c.l.b16 %v453
      %v806 = vunpack.c.l.b16 %v454
      %v807 = vunpack.c.l.b16 %v455
      %v808 = vunpack.c.l.b16 %v456
      %v809 = vunpack.c.l.b16 %v457
      %v810 = vunpack.c.l.b16 %v458
      %v811 = vunpack.c.l.b16 %v459
      %v812 = vunpack.c.l.b16 %v460
      %v813 = vunpack.c.l.b16 %v461
      %v814 = vunpack.c.l.b16 %v462
      %v815 = vunpack.c.l.b16 %v463
      %v816 = vunpack.c.l.b16 %v464
      %v817 = vunpack.c.l.b16 %v465
      %v818 = vunpack.c.l.b16 %v466
      %v819 = vunpack.c.l.b16 %v467
      %v820 = vunpack.c.l.b16 %v468
      %v821 = vunpack.c.l.b16 %v469
      %v822 = vunpack.c.l.b16 %v470
      %v823 = vunpack.c.l.b16 %v471
      %v824 = vunpack.c.l.b16 %v472
      %v825 = vunpack.c.l.b16 %v473
      %v826 = vunpack.c.l.b16 %v474
      %v827 = vunpack.c.l.b16 %v475
      %v828 = vunpack.c.l.b16 %v476
      %v829 = vunpack.c.l.b16 %v477
      %v830 = vunpack.c.l.b16 %v478
      %v831 = vunpack.c.l.b16 %v479
      %v832 = vunpack.c.l.b16 %v480
      %v833 = vunpack.c.l.b16 %v481
      %v834 = vunpack.c.l.b16 %v482
      %v835 = vunpack.c.l.b16 %v483
      %v836 = vunpack.c.l.b16 %v484
      %v837 = vunpack.c.l.b16 %v485
      %v838 = vunpack.c.l.b16 %v486
      %v839 = vunpack.c.l.b16 %v487
      %v840 = vunpack.c.l.b16 %v488
      %v841 = vpack.c.b16 %v794, %v793
      %v842 = vpack.c.b16 %v796, %v795
      %v843 = vpack.c.b16 %v798, %v797
      %v844 = vpack.c.b16 %v800, %v799
      %v845 = vpack.c.b16 %v802, %v801
      %v846 = vpack.c.b16 %v804, %v803
      %v847 = vpack.c.b16 %v806, %v805
      %v848 = vpack.c.b16 %v808, %v807
      %v849 = vpack.c.b16 %v810, %v809
      %v850 = vpack.c.b16 %v812, %v811
      %v851 = vpack.c.b16 %v814, %v813
      %v852 = vpack.c.b16 %v816, %v815
      %v853 = vpack.c.b16 %v818, %v817
      %v854 = vpack.c.b16 %v820, %v819
      %v855 = vpack.c.b16 %v822, %v821
      %v856 = vpack.c.b16 %v824, %v823
      %v857 = vpack.c.b16 %v826, %v825
      %v858 = vpack.c.b16 %v828, %v827
      %v859 = vpack.c.b16 %v830, %v829
      %v860 = vpack.c.b16 %v832, %v831
      %v861 = vpack.c.b16 %v834, %v833
      %v862 = vpack.c.b16 %v836, %v835
      %v863 = vpack.c.b16 %v838, %v837
      %v864 = vpack.c.b16 %v840, %v839
      %889 = vmatprep.subr.bf16.mxu0 0
      %890 = vmatpush1.bf16.msra.mxu0 %v848
      %891 = vmatprep.subr.bf16.mxu0 0
      %892 = vmatpush1.bf16.msra.mxu0 %v847
      %893 = vmatprep.subr.bf16.mxu0 0
      %894 = vmatpush1.bf16.msra.mxu0 %v846
      %895 = vmatprep.subr.bf16.mxu0 0
      %896 = vmatpush1.bf16.msra.mxu0 %v845
      %897 = vmatprep.subr.bf16.mxu0 0
      %898 = vmatpush1.bf16.msra.mxu0 %v844
      %899 = vmatprep.subr.bf16.mxu0 0
      %900 = vmatpush1.bf16.msra.mxu0 %v843
      %901 = vmatprep.subr.bf16.mxu0 0
      %902 = vmatpush1.bf16.msra.mxu0 %v842
      %903 = vmatprep.subr.bf16.mxu0 0
      %904 = vmatpush1.bf16.msra.mxu0 %v841
      %905 = vmatprep.subr.bf16.mxu0 0
      %906 = vmatpush2.bf16.msra.mxu0 %v856
      %907 = vmatprep.subr.bf16.mxu0 0
      %908 = vmatpush2.bf16.msra.mxu0 %v855
      %909 = vmatprep.subr.bf16.mxu0 0
      %910 = vmatpush2.bf16.msra.mxu0 %v854
      %911 = vmatprep.subr.bf16.mxu0 0
      %912 = vmatpush2.bf16.msra.mxu0 %v853
      %913 = vmatprep.subr.bf16.mxu0 0
      %914 = vmatpush2.bf16.msra.mxu0 %v852
      %915 = vmatprep.subr.bf16.mxu0 0
      %916 = vmatpush2.bf16.msra.mxu0 %v851
      %917 = vmatprep.subr.bf16.mxu0 0
      %918 = vmatpush2.bf16.msra.mxu0 %v850
      %919 = vmatprep.subr.bf16.mxu0 0
      %920 = vmatpush2.bf16.msra.mxu0 %v849
      %921 = vmatprep.mubr.bf16.mxu0 %v650
      %922 = vmatmul.mubr.bf16.gmra.mxu0 %v649
      %v923 = vpop.f32.mrf.mxu0
      %v924 = vadd.f32 0.0, %v923
      %v925 = vpop.f32.mrf.mxu0
      %v926 = vpop.f32.mrf.mxu0
      %v927 = vadd.f32 0.0, %v926
      %v928 = vpop.f32.mrf.mxu0
      %929 = vmatprep.mubr.bf16.mxu0 %v653
      %930 = vmatmul.mubr.bf16.gmra.mxu0 %v652
      %v931 = vpop.f32.mrf.mxu0
      %v932 = vadd.f32 0.0, %v931
      %v933 = vpop.f32.mrf.mxu0
      %v934 = vpop.f32.mrf.mxu0
      %v935 = vadd.f32 0.0, %v934
      %v936 = vpop.f32.mrf.mxu0
      %937 = vmatprep.mubr.bf16.mxu0 %v656
      %938 = vmatmul.mubr.bf16.gmra.mxu0 %v655
      %v939 = vpop.f32.mrf.mxu0
      %v940 = vadd.f32 0.0, %v939
      %v941 = vpop.f32.mrf.mxu0
      %v942 = vpop.f32.mrf.mxu0
      %v943 = vadd.f32 0.0, %v942
      %v944 = vpop.f32.mrf.mxu0
      %945 = vmatprep.mubr.bf16.mxu0 %v659
      %946 = vmatmul.mubr.bf16.gmra.mxu0 %v658
      %v947 = vpop.f32.mrf.mxu0
      %v948 = vadd.f32 0.0, %v947
      %v949 = vpop.f32.mrf.mxu0
      %v950 = vpop.f32.mrf.mxu0
      %v951 = vadd.f32 0.0, %v950
      %v952 = vpop.f32.mrf.mxu0
      %953 = vmatprep.mubr.bf16.mxu0 %v662
      %954 = vmatmul.mubr.bf16.gmra.mxu0 %v661
      %v955 = vpop.f32.mrf.mxu0
      %v956 = vadd.f32 0.0, %v955
      %v957 = vpop.f32.mrf.mxu0
      %v958 = vpop.f32.mrf.mxu0
      %v959 = vadd.f32 0.0, %v958
      %v960 = vpop.f32.mrf.mxu0
      %961 = vmatprep.mubr.bf16.mxu0 %v665
      %962 = vmatmul.mubr.bf16.gmra.mxu0 %v664
      %v963 = vpop.f32.mrf.mxu0
      %v964 = vadd.f32 0.0, %v963
      %v965 = vpop.f32.mrf.mxu0
      %v966 = vpop.f32.mrf.mxu0
      %v967 = vadd.f32 0.0, %v966
      %v968 = vpop.f32.mrf.mxu0
      %969 = vmatprep.mubr.bf16.mxu0 %v668
      %970 = vmatmul.mubr.bf16.gmra.mxu0 %v667
      %v971 = vpop.f32.mrf.mxu0
      %v972 = vadd.f32 0.0, %v971
      %v973 = vpop.f32.mrf.mxu0
      %v974 = vpop.f32.mrf.mxu0
      %v975 = vadd.f32 0.0, %v974
      %v976 = vpop.f32.mrf.mxu0
      %977 = vmatprep.mubr.bf16.mxu0 %v671
      %978 = vmatmul.mubr.bf16.gmra.mxu0 %v670
      %v979 = vpop.f32.mrf.mxu0
      %v980 = vadd.f32 0.0, %v979
      %v981 = vpop.f32.mrf.mxu0
      %v982 = vpop.f32.mrf.mxu0
      %v983 = vadd.f32 0.0, %v982
      %v984 = vpop.f32.mrf.mxu0
      %985 = vmatprep.mubr.bf16.mxu0 %v674
      %986 = vmatmul.mubr.bf16.gmra.mxu0 %v673
      %v987 = vpop.f32.mrf.mxu0
      %v988 = vadd.f32 0.0, %v987
      %v989 = vpop.f32.mrf.mxu0
      %v990 = vpop.f32.mrf.mxu0
      %v991 = vadd.f32 0.0, %v990
      %v992 = vpop.f32.mrf.mxu0
      %993 = vmatprep.mubr.bf16.mxu0 %v677
      %994 = vmatmul.mubr.bf16.gmra.mxu0 %v676
      %v995 = vpop.f32.mrf.mxu0
      %v996 = vadd.f32 0.0, %v995
      %v997 = vpop.f32.mrf.mxu0
      %v998 = vpop.f32.mrf.mxu0
      %v999 = vadd.f32 0.0, %v998
      %v1000 = vpop.f32.mrf.mxu0
      %1001 = vmatprep.mubr.bf16.mxu0 %v680
      %1002 = vmatmul.mubr.bf16.gmra.mxu0 %v679
      %v1003 = vpop.f32.mrf.mxu0
      %v1004 = vadd.f32 0.0, %v1003
      %v1005 = vpop.f32.mrf.mxu0
      %v1006 = vpop.f32.mrf.mxu0
      %v1007 = vadd.f32 0.0, %v1006
      %v1008 = vpop.f32.mrf.mxu0
      %1009 = vmatprep.mubr.bf16.mxu0 %v683
      %1010 = vmatmul.mubr.bf16.gmra.mxu0 %v682
      %v1011 = vpop.f32.mrf.mxu0
      %v1012 = vadd.f32 0.0, %v1011
      %v1013 = vpop.f32.mrf.mxu0
      %v1014 = vpop.f32.mrf.mxu0
      %v1015 = vadd.f32 0.0, %v1014
      %v1016 = vpop.f32.mrf.mxu0
      %1017 = vmatprep.mubr.bf16.mxu0 %v686
      %1018 = vmatmul.mubr.bf16.gmra.mxu0 %v685
      %v1019 = vpop.f32.mrf.mxu0
      %v1020 = vadd.f32 0.0, %v1019
      %v1021 = vpop.f32.mrf.mxu0
      %v1022 = vpop.f32.mrf.mxu0
      %v1023 = vadd.f32 0.0, %v1022
      %v1024 = vpop.f32.mrf.mxu0
      %1025 = vmatprep.mubr.bf16.mxu0 %v689
      %1026 = vmatmul.mubr.bf16.gmra.mxu0 %v688
      %v1027 = vpop.f32.mrf.mxu0
      %v1028 = vadd.f32 0.0, %v1027
      %v1029 = vpop.f32.mrf.mxu0
      %v1030 = vpop.f32.mrf.mxu0
      %v1031 = vadd.f32 0.0, %v1030
      %v1032 = vpop.f32.mrf.mxu0
      %1033 = vmatprep.mubr.bf16.mxu0 %v692
      %1034 = vmatmul.mubr.bf16.gmra.mxu0 %v691
      %v1035 = vpop.f32.mrf.mxu0
      %v1036 = vadd.f32 0.0, %v1035
      %v1037 = vpop.f32.mrf.mxu0
      %v1038 = vpop.f32.mrf.mxu0
      %v1039 = vadd.f32 0.0, %v1038
      %v1040 = vpop.f32.mrf.mxu0
      %1041 = vmatprep.mubr.bf16.mxu0 %v695
      %1042 = vmatmul.mubr.bf16.gmra.mxu0 %v694
      %v1043 = vpop.f32.mrf.mxu0
      %v1044 = vadd.f32 0.0, %v1043
      %v1045 = vpop.f32.mrf.mxu0
      %v1046 = vpop.f32.mrf.mxu0
      %v1047 = vadd.f32 0.0, %v1046
      %v1048 = vpop.f32.mrf.mxu0
      %1049 = vdwg.mxu0
      %1050 = vmatprep.subr.bf16.mxu0 0
      %1051 = vmatpush1.bf16.msra.mxu0 %v864
      %1052 = vmatprep.subr.bf16.mxu0 0
      %1053 = vmatpush1.bf16.msra.mxu0 %v863
      %1054 = vmatprep.subr.bf16.mxu0 0
      %1055 = vmatpush1.bf16.msra.mxu0 %v862
      %1056 = vmatprep.subr.bf16.mxu0 0
      %1057 = vmatpush1.bf16.msra.mxu0 %v861
      %1058 = vmatprep.subr.bf16.mxu0 0
      %1059 = vmatpush1.bf16.msra.mxu0 %v860
      %1060 = vmatprep.subr.bf16.mxu0 0
      %1061 = vmatpush1.bf16.msra.mxu0 %v859
      %1062 = vmatprep.subr.bf16.mxu0 0
      %1063 = vmatpush1.bf16.msra.mxu0 %v858
      %1064 = vmatprep.subr.bf16.mxu0 0
      %1065 = vmatpush1.bf16.msra.mxu0 %v857
      %1066 = vmatprep.subr.bf16.mxu0 0
      %1067 = vmatpush2.bf16.msra.mxu0 0
      %1068 = vmatprep.subr.bf16.mxu0 0
      %1069 = vmatpush2.bf16.msra.mxu0 0
      %1070 = vmatprep.subr.bf16.mxu0 0
      %1071 = vmatpush2.bf16.msra.mxu0 0
      %1072 = vmatprep.subr.bf16.mxu0 0
      %1073 = vmatpush2.bf16.msra.mxu0 0
      %1074 = vmatprep.subr.bf16.mxu0 0
      %1075 = vmatpush2.bf16.msra.mxu0 0
      %1076 = vmatprep.subr.bf16.mxu0 0
      %1077 = vmatpush2.bf16.msra.mxu0 0
      %1078 = vmatprep.subr.bf16.mxu0 0
      %1079 = vmatpush2.bf16.msra.mxu0 0
      %1080 = vmatprep.subr.bf16.mxu0 0
      %1081 = vmatpush2.bf16.msra.mxu0 0
      %1082 = vmatprep.mubr.bf16.mxu0 0
      %1083 = vmatmul.mubr.bf16.gmra.mxu0 %v651
      %v1084 = vpop.f32.mrf.mxu0
      %v1085 = vadd.f32 %v924, %v1084
      %v1086 = vpop.f32.mrf.mxu0
      %v1087 = vpop.f32.mrf.mxu0
      %v1088 = vadd.f32 %v927, %v1087
      %v1089 = vpop.f32.mrf.mxu0
      %1090 = vmatprep.mubr.bf16.mxu0 0
      %1091 = vmatmul.mubr.bf16.gmra.mxu0 %v654
      %v1092 = vpop.f32.mrf.mxu0
      %v1093 = vadd.f32 %v932, %v1092
      %v1094 = vpop.f32.mrf.mxu0
      %v1095 = vpop.f32.mrf.mxu0
      %v1096 = vadd.f32 %v935, %v1095
      %v1097 = vpop.f32.mrf.mxu0
      %1098 = vmatprep.mubr.bf16.mxu0 0
      %1099 = vmatmul.mubr.bf16.gmra.mxu0 %v657
      %v1100 = vpop.f32.mrf.mxu0
      %v1101 = vadd.f32 %v940, %v1100
      %v1102 = vpop.f32.mrf.mxu0
      %v1103 = vpop.f32.mrf.mxu0
      %v1104 = vadd.f32 %v943, %v1103
      %v1105 = vpop.f32.mrf.mxu0
      %1106 = vmatprep.mubr.bf16.mxu0 0
      %1107 = vmatmul.mubr.bf16.gmra.mxu0 %v660
      %v1108 = vpop.f32.mrf.mxu0
      %v1109 = vadd.f32 %v948, %v1108
      %v1110 = vpop.f32.mrf.mxu0
      %v1111 = vpop.f32.mrf.mxu0
      %v1112 = vadd.f32 %v951, %v1111
      %v1113 = vpop.f32.mrf.mxu0
      %1114 = vmatprep.mubr.bf16.mxu0 0
      %1115 = vmatmul.mubr.bf16.gmra.mxu0 %v663
      %v1116 = vpop.f32.mrf.mxu0
      %v1117 = vadd.f32 %v956, %v1116
      %v1118 = vpop.f32.mrf.mxu0
      %v1119 = vpop.f32.mrf.mxu0
      %v1120 = vadd.f32 %v959, %v1119
      %v1121 = vpop.f32.mrf.mxu0
      %1122 = vmatprep.mubr.bf16.mxu0 0
      %1123 = vmatmul.mubr.bf16.gmra.mxu0 %v666
      %v1124 = vpop.f32.mrf.mxu0
      %v1125 = vadd.f32 %v964, %v1124
      %v1126 = vpop.f32.mrf.mxu0
      %v1127 = vpop.f32.mrf.mxu0
      %v1128 = vadd.f32 %v967, %v1127
      %v1129 = vpop.f32.mrf.mxu0
      %1130 = vmatprep.mubr.bf16.mxu0 0
      %1131 = vmatmul.mubr.bf16.gmra.mxu0 %v669
      %v1132 = vpop.f32.mrf.mxu0
      %v1133 = vadd.f32 %v972, %v1132
      %v1134 = vpop.f32.mrf.mxu0
      %v1135 = vpop.f32.mrf.mxu0
      %v1136 = vadd.f32 %v975, %v1135
      %v1137 = vpop.f32.mrf.mxu0
      %1138 = vmatprep.mubr.bf16.mxu0 0
      %1139 = vmatmul.mubr.bf16.gmra.mxu0 %v672
      %v1140 = vpop.f32.mrf.mxu0
      %v1141 = vadd.f32 %v980, %v1140
      %v1142 = vpop.f32.mrf.mxu0
      %v1143 = vpop.f32.mrf.mxu0
      %v1144 = vadd.f32 %v983, %v1143
      %v1145 = vpop.f32.mrf.mxu0
      %1146 = vmatprep.mubr.bf16.mxu0 0
      %1147 = vmatmul.mubr.bf16.gmra.mxu0 %v675
      %v1148 = vpop.f32.mrf.mxu0
      %v1149 = vadd.f32 %v988, %v1148
      %v1150 = vpop.f32.mrf.mxu0
      %v1151 = vpop.f32.mrf.mxu0
      %v1152 = vadd.f32 %v991, %v1151
      %v1153 = vpop.f32.mrf.mxu0
      %1154 = vmatprep.mubr.bf16.mxu0 0
      %1155 = vmatmul.mubr.bf16.gmra.mxu0 %v678
      %v1156 = vpop.f32.mrf.mxu0
      %v1157 = vadd.f32 %v996, %v1156
      %v1158 = vpop.f32.mrf.mxu0
      %v1159 = vpop.f32.mrf.mxu0
      %v1160 = vadd.f32 %v999, %v1159
      %v1161 = vpop.f32.mrf.mxu0
      %1162 = vmatprep.mubr.bf16.mxu0 0
      %1163 = vmatmul.mubr.bf16.gmra.mxu0 %v681
      %v1164 = vpop.f32.mrf.mxu0
      %v1165 = vadd.f32 %v1004, %v1164
      %v1166 = vpop.f32.mrf.mxu0
      %v1167 = vpop.f32.mrf.mxu0
      %v1168 = vadd.f32 %v1007, %v1167
      %v1169 = vpop.f32.mrf.mxu0
      %1170 = vmatprep.mubr.bf16.mxu0 0
      %1171 = vmatmul.mubr.bf16.gmra.mxu0 %v684
      %v1172 = vpop.f32.mrf.mxu0
      %v1173 = vadd.f32 %v1012, %v1172
      %v1174 = vpop.f32.mrf.mxu0
      %v1175 = vpop.f32.mrf.mxu0
      %v1176 = vadd.f32 %v1015, %v1175
      %v1177 = vpop.f32.mrf.mxu0
      %1178 = vmatprep.mubr.bf16.mxu0 0
      %1179 = vmatmul.mubr.bf16.gmra.mxu0 %v687
      %v1180 = vpop.f32.mrf.mxu0
      %v1181 = vadd.f32 %v1020, %v1180
      %v1182 = vpop.f32.mrf.mxu0
      %v1183 = vpop.f32.mrf.mxu0
      %v1184 = vadd.f32 %v1023, %v1183
      %v1185 = vpop.f32.mrf.mxu0
      %1186 = vmatprep.mubr.bf16.mxu0 0
      %1187 = vmatmul.mubr.bf16.gmra.mxu0 %v690
      %v1188 = vpop.f32.mrf.mxu0
      %v1189 = vadd.f32 %v1028, %v1188
      %v1190 = vpop.f32.mrf.mxu0
      %v1191 = vpop.f32.mrf.mxu0
      %v1192 = vadd.f32 %v1031, %v1191
      %v1193 = vpop.f32.mrf.mxu0
      %1194 = vmatprep.mubr.bf16.mxu0 0
      %1195 = vmatmul.mubr.bf16.gmra.mxu0 %v693
      %v1196 = vpop.f32.mrf.mxu0
      %v1197 = vadd.f32 %v1036, %v1196
      %v1198 = vpop.f32.mrf.mxu0
      %v1199 = vpop.f32.mrf.mxu0
      %v1200 = vadd.f32 %v1039, %v1199
      %v1201 = vpop.f32.mrf.mxu0
      %1202 = vmatprep.mubr.bf16.mxu0 0
      %1203 = vmatmul.mubr.bf16.gmra.mxu0 %v696
      %v1204 = vpop.f32.mrf.mxu0
      %v1205 = vadd.f32 %v1044, %v1204
      %v1206 = vpop.f32.mrf.mxu0
      %v1207 = vpop.f32.mrf.mxu0
      %v1208 = vadd.f32 %v1047, %v1207
      %v1209 = vpop.f32.mrf.mxu0
      %1210 = vdwg.mxu0
      %v1211 = vadd.f32 %v345, %v1085
      %v1212 = vadd.f32 %v346, %v1088
      %v1213 = vadd.f32 %v347, %v1093
      %v1214 = vadd.f32 %v348, %v1096
      %v1215 = vadd.f32 %v349, %v1101
      %v1216 = vadd.f32 %v350, %v1104
      %v1217 = vadd.f32 %v351, %v1109
      %v1218 = vadd.f32 %v352, %v1112
      %v1219 = vadd.f32 %v353, %v1117
      %v1220 = vadd.f32 %v354, %v1120
      %v1221 = vadd.f32 %v355, %v1125
      %v1222 = vadd.f32 %v356, %v1128
      %v1223 = vadd.f32 %v357, %v1133
      %v1224 = vadd.f32 %v358, %v1136
      %v1225 = vadd.f32 %v359, %v1141
      %v1226 = vadd.f32 %v360, %v1144
      %v1227 = vadd.f32 %v361, %v1149
      %v1228 = vadd.f32 %v362, %v1152
      %v1229 = vadd.f32 %v363, %v1157
      %v1230 = vadd.f32 %v364, %v1160
      %v1231 = vadd.f32 %v365, %v1165
      %v1232 = vadd.f32 %v366, %v1168
      %v1233 = vadd.f32 %v367, %v1173
      %v1234 = vadd.f32 %v368, %v1176
      %v1235 = vadd.f32 %v369, %v1181
      %v1236 = vadd.f32 %v370, %v1184
      %v1237 = vadd.f32 %v371, %v1189
      %v1238 = vadd.f32 %v372, %v1192
      %v1239 = vadd.f32 %v373, %v1197
      %v1240 = vadd.f32 %v374, %v1200
      %v1241 = vadd.f32 %v375, %v1205
      %v1242 = vadd.f32 %v376, %v1208
      %1243 = vst [vmem:[#allocation2] sm:$0xff] %v1211
      %1244 = vst [vmem:[#allocation2 + $0x8] sm:$0xff] %v1212
      %1245 = vst [vmem:[#allocation2 + $0x10] sm:$0xff] %v1213
      %1246 = vst [vmem:[#allocation2 + $0x18] sm:$0xff] %v1214
      %1247 = vst [vmem:[#allocation2 + $0x20] sm:$0xff] %v1215
      %1248 = vst [vmem:[#allocation2 + $0x28] sm:$0xff] %v1216
      %1249 = vst [vmem:[#allocation2 + $0x30] sm:$0xff] %v1217
      %1250 = vst [vmem:[#allocation2 + $0x38] sm:$0xff] %v1218
      %1251 = vst [vmem:[#allocation2 + $0x40] sm:$0xff] %v1219
      %1252 = vst [vmem:[#allocation2 + $0x48] sm:$0xff] %v1220
      %1253 = vst [vmem:[#allocation2 + $0x50] sm:$0xff] %v1221
      %1254 = vst [vmem:[#allocation2 + $0x58] sm:$0xff] %v1222
      %1255 = vst [vmem:[#allocation2 + $0x60] sm:$0xff] %v1223
      %1256 = vst [vmem:[#allocation2 + $0x68] sm:$0xff] %v1224
      %1257 = vst [vmem:[#allocation2 + $0x70] sm:$0xff] %v1225
      %1258 = vst [vmem:[#allocation2 + $0x78] sm:$0xff] %v1226
      %1259 = vst [vmem:[#allocation2 + $0x80] sm:$0xff] %v1227
      %1260 = vst [vmem:[#allocation2 + $0x88] sm:$0xff] %v1228
      %1261 = vst [vmem:[#allocation2 + $0x90] sm:$0xff] %v1229
      %1262 = vst [vmem:[#allocation2 + $0x98] sm:$0xff] %v1230
      %1263 = vst [vmem:[#allocation2 + $0xa0] sm:$0xff] %v1231
      %1264 = vst [vmem:[#allocation2 + $0xa8] sm:$0xff] %v1232
      %1265 = vst [vmem:[#allocation2 + $0xb0] sm:$0xff] %v1233
      %1266 = vst [vmem:[#allocation2 + $0xb8] sm:$0xff] %v1234
      %1267 = vst [vmem:[#allocation2 + $0xc0] sm:$0xff] %v1235
      %1268 = vst [vmem:[#allocation2 + $0xc8] sm:$0xff] %v1236
      %1269 = vst [vmem:[#allocation2 + $0xd0] sm:$0xff] %v1237
      %1270 = vst [vmem:[#allocation2 + $0xd8] sm:$0xff] %v1238
      %1271 = vst [vmem:[#allocation2 + $0xe0] sm:$0xff] %v1239
      %1272 = vst [vmem:[#allocation2 + $0xe8] sm:$0xff] %v1240
      %1273 = vst [vmem:[#allocation2 + $0xf0] sm:$0xff] %v1241
      %1274 = vst [vmem:[#allocation2 + $0xf8] sm:$0xff] %v1242
      // Predicated region
      $region41: #{forward.2} parent=35 // pred_check
        %p1275 = pneg %p309
      $region42: #{forward.2} parent=35 // pred_check_branch
        %1277 = sbr.rel (%p1275) target = $region44
      $region43: #{forward.2} parent=35 // pred_region
        %v1278 = vld [vmem:[#allocation2] sm:$0xff]
        %v1279 = vld [vmem:[#allocation2 + $0x8] sm:$0xff]
        %v1280 = vld [vmem:[#allocation2 + $0x10] sm:$0xff]
        %v1281 = vld [vmem:[#allocation2 + $0x18] sm:$0xff]
        %v1282 = vld [vmem:[#allocation2 + $0x20] sm:$0xff]
        %v1283 = vld [vmem:[#allocation2 + $0x28] sm:$0xff]
        %v1284 = vld [vmem:[#allocation2 + $0x30] sm:$0xff]
        %v1285 = vld [vmem:[#allocation2 + $0x38] sm:$0xff]
        %v1286 = vld [vmem:[#allocation2 + $0x40] sm:$0xff]
        %v1287 = vld [vmem:[#allocation2 + $0x48] sm:$0xff]
        %v1288 = vld [vmem:[#allocation2 + $0x50] sm:$0xff]
        %v1289 = vld [vmem:[#allocation2 + $0x58] sm:$0xff]
        %v1290 = vld [vmem:[#allocation2 + $0x60] sm:$0xff]
        %v1291 = vld [vmem:[#allocation2 + $0x68] sm:$0xff]
        %v1292 = vld [vmem:[#allocation2 + $0x70] sm:$0xff]
        %v1293 = vld [vmem:[#allocation2 + $0x78] sm:$0xff]
        %v1294 = vld [vmem:[#allocation2 + $0x80] sm:$0xff]
        %v1295 = vld [vmem:[#allocation2 + $0x88] sm:$0xff]
        %v1296 = vld [vmem:[#allocation2 + $0x90] sm:$0xff]
        %v1297 = vld [vmem:[#allocation2 + $0x98] sm:$0xff]
        %v1298 = vld [vmem:[#allocation2 + $0xa0] sm:$0xff]
        %v1299 = vld [vmem:[#allocation2 + $0xa8] sm:$0xff]
        %v1300 = vld [vmem:[#allocation2 + $0xb0] sm:$0xff]
        %v1301 = vld [vmem:[#allocation2 + $0xb8] sm:$0xff]
        %v1302 = vld [vmem:[#allocation2 + $0xc0] sm:$0xff]
        %v1303 = vld [vmem:[#allocation2 + $0xc8] sm:$0xff]
        %v1304 = vld [vmem:[#allocation2 + $0xd0] sm:$0xff]
        %v1305 = vld [vmem:[#allocation2 + $0xd8] sm:$0xff]
        %v1306 = vld [vmem:[#allocation2 + $0xe0] sm:$0xff]
        %v1307 = vld [vmem:[#allocation2 + $0xe8] sm:$0xff]
        %v1308 = vld [vmem:[#allocation2 + $0xf0] sm:$0xff]
        %v1309 = vld [vmem:[#allocation2 + $0xf8] sm:$0xff]
        %v1310 = vld [vmem:[%s295] sm:$0x1]
        %v1312 = vlaneseq
        %v1313 = vshrl.u32 %v1312, 7
        %v1314 = vsub.s32 0, %v1313
        %v1315 = vrot.slane %v1310, %v1314
        %v1317 = vmul.f32 %v1278, %v1315
        %v1318 = vmul.f32 %v1279, %v1315
        %v1319 = vmul.f32 %v1280, %v1315
        %v1320 = vmul.f32 %v1281, %v1315
        %v1321 = vmul.f32 %v1282, %v1315
        %v1322 = vmul.f32 %v1283, %v1315
        %v1323 = vmul.f32 %v1284, %v1315
        %v1324 = vmul.f32 %v1285, %v1315
        %v1325 = vmul.f32 %v1286, %v1315
        %v1326 = vmul.f32 %v1287, %v1315
        %v1327 = vmul.f32 %v1288, %v1315
        %v1328 = vmul.f32 %v1289, %v1315
        %v1329 = vmul.f32 %v1290, %v1315
        %v1330 = vmul.f32 %v1291, %v1315
        %v1331 = vmul.f32 %v1292, %v1315
        %v1332 = vmul.f32 %v1293, %v1315
        %v1333 = vmul.f32 %v1294, %v1315
        %v1334 = vmul.f32 %v1295, %v1315
        %v1335 = vmul.f32 %v1296, %v1315
        %v1336 = vmul.f32 %v1297, %v1315
        %v1337 = vmul.f32 %v1298, %v1315
        %v1338 = vmul.f32 %v1299, %v1315
        %v1339 = vmul.f32 %v1300, %v1315
        %v1340 = vmul.f32 %v1301, %v1315
        %v1341 = vmul.f32 %v1302, %v1315
        %v1342 = vmul.f32 %v1303, %v1315
        %v1343 = vmul.f32 %v1304, %v1315
        %v1344 = vmul.f32 %v1305, %v1315
        %v1345 = vmul.f32 %v1306, %v1315
        %v1346 = vmul.f32 %v1307, %v1315
        %v1347 = vmul.f32 %v1308, %v1315
        %v1348 = vmul.f32 %v1309, %v1315
        %v1349 = vld [vmem:[%s298] sm:$0x1]
        %v1351 = vlaneseq
        %v1352 = vshrl.u32 %v1351, 7
        %v1353 = vsub.s32 0, %v1352
        %v1354 = vrot.slane %v1349, %v1353
        %v1356 = vadd.f32 %v1317, %v1354
        %v1357 = vadd.f32 %v1318, %v1354
        %v1358 = vadd.f32 %v1319, %v1354
        %v1359 = vadd.f32 %v1320, %v1354
        %v1360 = vadd.f32 %v1321, %v1354
        %v1361 = vadd.f32 %v1322, %v1354
        %v1362 = vadd.f32 %v1323, %v1354
        %v1363 = vadd.f32 %v1324, %v1354
        %v1364 = vadd.f32 %v1325, %v1354
        %v1365 = vadd.f32 %v1326, %v1354
        %v1366 = vadd.f32 %v1327, %v1354
        %v1367 = vadd.f32 %v1328, %v1354
        %v1368 = vadd.f32 %v1329, %v1354
        %v1369 = vadd.f32 %v1330, %v1354
        %v1370 = vadd.f32 %v1331, %v1354
        %v1371 = vadd.f32 %v1332, %v1354
        %v1372 = vadd.f32 %v1333, %v1354
        %v1373 = vadd.f32 %v1334, %v1354
        %v1374 = vadd.f32 %v1335, %v1354
        %v1375 = vadd.f32 %v1336, %v1354
        %v1376 = vadd.f32 %v1337, %v1354
        %v1377 = vadd.f32 %v1338, %v1354
        %v1378 = vadd.f32 %v1339, %v1354
        %v1379 = vadd.f32 %v1340, %v1354
        %v1380 = vadd.f32 %v1341, %v1354
        %v1381 = vadd.f32 %v1342, %v1354
        %v1382 = vadd.f32 %v1343, %v1354
        %v1383 = vadd.f32 %v1344, %v1354
        %v1384 = vadd.f32 %v1345, %v1354
        %v1385 = vadd.f32 %v1346, %v1354
        %v1386 = vadd.f32 %v1347, %v1354
        %v1387 = vadd.f32 %v1348, %v1354
        %v1388 = vmax.f32 %v1356, 0.0
        %v1389 = vmax.f32 %v1357, 0.0
        %v1390 = vmax.f32 %v1358, 0.0
        %v1391 = vmax.f32 %v1359, 0.0
        %v1392 = vmax.f32 %v1360, 0.0
        %v1393 = vmax.f32 %v1361, 0.0
        %v1394 = vmax.f32 %v1362, 0.0
        %v1395 = vmax.f32 %v1363, 0.0
        %v1396 = vmax.f32 %v1364, 0.0
        %v1397 = vmax.f32 %v1365, 0.0
        %v1398 = vmax.f32 %v1366, 0.0
        %v1399 = vmax.f32 %v1367, 0.0
        %v1400 = vmax.f32 %v1368, 0.0
        %v1401 = vmax.f32 %v1369, 0.0
        %v1402 = vmax.f32 %v1370, 0.0
        %v1403 = vmax.f32 %v1371, 0.0
        %v1404 = vmax.f32 %v1372, 0.0
        %v1405 = vmax.f32 %v1373, 0.0
        %v1406 = vmax.f32 %v1374, 0.0
        %v1407 = vmax.f32 %v1375, 0.0
        %v1408 = vmax.f32 %v1376, 0.0
        %v1409 = vmax.f32 %v1377, 0.0
        %v1410 = vmax.f32 %v1378, 0.0
        %v1411 = vmax.f32 %v1379, 0.0
        %v1412 = vmax.f32 %v1380, 0.0
        %v1413 = vmax.f32 %v1381, 0.0
        %v1414 = vmax.f32 %v1382, 0.0
        %v1415 = vmax.f32 %v1383, 0.0
        %v1416 = vmax.f32 %v1384, 0.0
        %v1417 = vmax.f32 %v1385, 0.0
        %v1418 = vmax.f32 %v1386, 0.0
        %v1419 = vmax.f32 %v1387, 0.0
        %1420 = vst [vmem:[%s306] sm:$0xff] %v1388
        %1421 = vst [vmem:[%s306 + $0x8] sm:$0xff] %v1389
        %1422 = vst [vmem:[%s306 + $0x10] sm:$0xff] %v1390
        %1423 = vst [vmem:[%s306 + $0x18] sm:$0xff] %v1391
        %1424 = vst [vmem:[%s306 + $0x20] sm:$0xff] %v1392
        %1425 = vst [vmem:[%s306 + $0x28] sm:$0xff] %v1393
        %1426 = vst [vmem:[%s306 + $0x30] sm:$0xff] %v1394
        %1427 = vst [vmem:[%s306 + $0x38] sm:$0xff] %v1395
        %1428 = vst [vmem:[%s306 + $0x40] sm:$0xff] %v1396
        %1429 = vst [vmem:[%s306 + $0x48] sm:$0xff] %v1397
        %1430 = vst [vmem:[%s306 + $0x50] sm:$0xff] %v1398
        %1431 = vst [vmem:[%s306 + $0x58] sm:$0xff] %v1399
        %1432 = vst [vmem:[%s306 + $0x60] sm:$0xff] %v1400
        %1433 = vst [vmem:[%s306 + $0x68] sm:$0xff] %v1401
        %1434 = vst [vmem:[%s306 + $0x70] sm:$0xff] %v1402
        %1435 = vst [vmem:[%s306 + $0x78] sm:$0xff] %v1403
        %1436 = vst [vmem:[%s306 + $0x80] sm:$0xff] %v1404
        %1437 = vst [vmem:[%s306 + $0x88] sm:$0xff] %v1405
        %1438 = vst [vmem:[%s306 + $0x90] sm:$0xff] %v1406
        %1439 = vst [vmem:[%s306 + $0x98] sm:$0xff] %v1407
        %1440 = vst [vmem:[%s306 + $0xa0] sm:$0xff] %v1408
        %1441 = vst [vmem:[%s306 + $0xa8] sm:$0xff] %v1409
        %1442 = vst [vmem:[%s306 + $0xb0] sm:$0xff] %v1410
        %1443 = vst [vmem:[%s306 + $0xb8] sm:$0xff] %v1411
        %1444 = vst [vmem:[%s306 + $0xc0] sm:$0xff] %v1412
        %1445 = vst [vmem:[%s306 + $0xc8] sm:$0xff] %v1413
        %1446 = vst [vmem:[%s306 + $0xd0] sm:$0xff] %v1414
        %1447 = vst [vmem:[%s306 + $0xd8] sm:$0xff] %v1415
        %1448 = vst [vmem:[%s306 + $0xe0] sm:$0xff] %v1416
        %1449 = vst [vmem:[%s306 + $0xe8] sm:$0xff] %v1417
        %1450 = vst [vmem:[%s306 + $0xf0] sm:$0xff] %v1418
        %1451 = vst [vmem:[%s306 + $0xf8] sm:$0xff] %v1419
      $region44: #{forward.2} parent=35 // pred_fallthru
        _
      %s1452 = smul.u32 32, %s20
      %p1453 = scmp.lt.s32.totalorder %s1452, 63
      %s1454 = scalar_select %p1453, %s1452, 63
      %p1455 = scmp.lt.s32.totalorder %s21, 0
      %s1456 = scalar_select %p1455, %s21, 0
      %s1457 = sadd.s32 %s1456, %s1454
      %s1458 = smul.addr %s1457, 8
      %s1459 = scalar_lea.vmem %s4, %s1458
      // Predicated region
      $region45: #{forward.2} parent=35 // pred_check
        %p1460 = pneg %p162
      $region46: #{forward.2} parent=35 // pred_check_branch
        %1462 = sbr.rel (%p1460) target = $region48
      $region47: #{forward.2} parent=35 // pred_region
        %s1463 = smul.u32 32, %s20
      $region48: #{forward.2} parent=35 // pred_fallthru
        _
    $region36: #{forward.2} parent=5 // pred_fallthru
      _
    %p1464 = scmp.le.s32.totalorder 2, %s10
    // Predicated region
    $region49: #{forward.2} parent=5 // pred_check
      %p1465 = pneg %p1464
    $region50: #{forward.2} parent=5 // pred_check_branch
      %1467 = sbr.rel (%p1465) target = $region52
    $region51: #{forward.2} parent=5 // pred_region
      %s1468 = ssub.s32 %s10, 2
      // Predicated region
      $region53: #{forward.2} parent=51 // pred_check
        %p1469 = pneg %p168
      $region54: #{forward.2} parent=51 // pred_check_branch
        %1471 = sbr.rel (%p1469) target = $region56
      $region55: #{forward.2} parent=51 // pred_region
        %s1472 = smul.u32 32, %s23
        %p1473 = scmp.lt.s32.totalorder %s1472, 63
        %s1474 = scalar_select %p1473, %s1472, 63
        %p1475 = scmp.lt.s32.totalorder %s24, 0
        %s1476 = scalar_select %p1475, %s24, 0
        %s1477 = sadd.s32 %s1476, %s1474
        %s1478 = smul.addr %s1477, 8
        %s1479 = scalar_lea.vmem %s4, %s1478
      $region56: #{forward.2} parent=51 // pred_fallthru
        _
    $region52: #{forward.2} parent=5 // pred_fallthru
      _
  $region6: #{forward.2} parent=0 // loop_footer
    %s14 = sadd.s32 1, %s10
  $region7: #{forward.2} parent=0 // loop_footer_branch
    %9 = sbr.rel target = $region3
  $region8: #{forward.2} parent=0 // loop_exit
    _

// kernel: forward.3
$region0: #{forward.3}
  #allocation0 [shape = 'u32[]', space=smem, size = 0x4, offset = 0x4, fixed_abs, tag = 'smem constant byte address 0x4 - core index']
  #allocation1 [shape = 'u32[144,128]{1,0:T(1,128)}', space=vmem, size = 0x12000, scoped, tag = 'internal scratch']
  #allocation2 [shape = 'f32[256,128]{1,0:T(8,128)}', space=vmem, size = 0x20000, scoped, tag = 'scratch operand']
  %s0 = inlined_call_operand.vmem [shape: bf16[512,384], index: 0, kind: input, shape index: {}]
  %s1 = inlined_call_operand.vmem [shape: bf16[384,128], index: 1, kind: input, shape index: {}]
  %s2 = inlined_call_operand.vmem [shape: f32[1,128], index: 2, kind: input, shape index: {}]
  %s3 = inlined_call_operand.vmem [shape: f32[1,128], index: 3, kind: input, shape index: {}]
  %s4 = inlined_call_operand.hbm [shape: f32[512,128], index: 4, kind: output, shape index: {}]
  %s5 = sld [smem:[#allocation0]]
  $region57: #{forward.3} parent=0
    _
  %s7 = ssub.s32 1, %s5
  %s8 = scalar_select 0, %s7, %s5
  $region1: #{forward.3} parent=0
    #allocation3 [shape = 'u8[262144]{0}', space=vmem, size = 0x40000, scoped, tag = 'output window, operand 0']
    #allocation4 [shape = 's32[2]{0}', space=sflag, size = 0x8, scoped, tag = 'scoped memory for forward.3']
    %9 = vsyncpa [#allocation4], 0
    %s10 = scalar_lea.sflag [#allocation4], 1
    %11 = vsyncpa %s10, 0
    loop: start=0, step=1, limit=4
    $region2: #{forward.3} parent=1 // loop_pre_header
      _
    $region3: #{forward.3} parent=1 // loop_header
      %s13 = sphi 0, %s17
      %p14 = scmp.ge.s32.totalorder %s13, 4
      %s20 = sphi 0, %s39
      %s21 = sphi 0, %s35
      %s22 = sphi 0, %s31
      %s23 = sphi 0, %s20
      %s24 = sphi 0, %s21
      %s25 = sphi 0, %s22
      %s26 = sphi 0, %s23
      %s27 = sphi 0, %s24
      %s28 = sphi 0, %s25
      %s44 = sphi 0, %s46
      %s47 = sphi 0, %s44
      %s48 = sphi 0, %s47
      %s64 = sphi 0, %s48
      %s72 = sphi 0, %s74
      %s75 = sphi 0, %s72
      %s76 = sphi 0, %s75
      %s92 = sphi 0, %s76
      %s98 = sphi 0, %s100
      %s101 = sphi 0, %s98
      %s102 = sphi 0, %s101
      %s118 = sphi 0, %s102
      %s124 = sphi 0, %s126
      %s127 = sphi 0, %s124
      %s128 = sphi 0, %s127
      %s144 = sphi 0, %s128
      %s152 = sphi 0, %s154
      %s155 = sphi 0, %s152
      %s156 = sphi 0, %s155
      %s172 = sphi 0, %s156
    $region4: #{forward.3} parent=1 // loop_header_branch
      %16 = sbr.rel (%p14) target = $region8
    $region5: #{forward.3} parent=1 // loop_body
      %s18 = ssub.s32 %s13, 1
      %s19 = ssub.s32 %s13, 2
      %s29 = sadd.s32 1, %s22
      %p30 = scmp.ge.s32.totalorder %s29, 1
      %s31 = scalar_select %p30, 0, %s29
      %s32 = sadd.s32 1, %s21
      %s33 = scalar_select %p30, %s32, %s21
      %p34 = scmp.ge.s32.totalorder %s33, 1
      %s35 = scalar_select %p34, 0, %s33
      %s36 = sadd.s32 1, %s20
      %s37 = scalar_select %p34, %s36, %s20
      %p38 = scmp.ge.s32.totalorder %s37, 2
      %s39 = scalar_select %p38, 0, %s37
      %s40 = ssub.s32 %s20, %s39
      %s41 = ssub.s32 %s22, %s31
      %s42 = sor.u32 %s40, %s41
      %p43 = scmp.eq.s32.totalorder %s42, 0
      %s45 = sadd.s32 %s44, 1
      %s46 = scalar_select %p43, %s44, %s45
      %p49 = pneg %p43
      %p50 = scmp.eq.s32.totalorder %s13, 1
      %p51 = por %p49, %p50
      %p52 = scmp.ne.s32.totalorder %s44, %s47
      %p53 = scmp.eq.s32.totalorder %s13, 0
      %p54 = por %p52, %p53
      %p55 = scmp.ne.s32.totalorder %s44, %s47
      %p56 = scmp.eq.s32.totalorder %s18, 1
      %p57 = por %p55, %p56
      %p58 = scmp.ne.s32.totalorder %s47, %s48
      %p59 = scmp.eq.s32.totalorder %s18, 0
      %p60 = por %p58, %p59
      %p61 = scmp.ne.s32.totalorder %s47, %s48
      %p62 = scmp.eq.s32.totalorder %s19, 1
      %p63 = por %p61, %p62
      %p65 = scmp.ne.s32.totalorder %s48, %s64
      %p66 = scmp.eq.s32.totalorder %s19, 0
      %p67 = por %p65, %p66
      %s68 = ssub.s32 %s22, %s31
      %s69 = ssub.s32 %s21, %s35
      %s70 = sor.u32 %s68, %s69
      %p71 = scmp.eq.s32.totalorder %s70, 0
      %s73 = sadd.s32 %s72, 1
      %s74 = scalar_select %p71, %s72, %s73
      %p77 = pneg %p71
      %p78 = scmp.eq.s32.totalorder %s13, 1
      %p79 = por %p77, %p78
      %p80 = scmp.ne.s32.totalorder %s72, %s75
      %p81 = scmp.eq.s32.totalorder %s13, 0
      %p82 = por %p80, %p81
      %p83 = scmp.ne.s32.totalorder %s72, %s75
      %p84 = scmp.eq.s32.totalorder %s18, 1
      %p85 = por %p83, %p84
      %p86 = scmp.ne.s32.totalorder %s75, %s76
      %p87 = scmp.eq.s32.totalorder %s18, 0
      %p88 = por %p86, %p87
      %p89 = scmp.ne.s32.totalorder %s75, %s76
      %p90 = scmp.eq.s32.totalorder %s19, 1
      %p91 = por %p89, %p90
      %p93 = scmp.ne.s32.totalorder %s76, %s92
      %p94 = scmp.eq.s32.totalorder %s19, 0
      %p95 = por %p93, %p94
      %s96 = ssub.s32 %s21, %s35
      %p97 = scmp.eq.s32.totalorder %s96, 0
      %s99 = sadd.s32 %s98, 1
      %s100 = scalar_select %p97, %s98, %s99
      %p103 = pneg %p97
      %p104 = scmp.eq.s32.totalorder %s13, 1
      %p105 = por %p103, %p104
      %p106 = scmp.ne.s32.totalorder %s98, %s101
      %p107 = scmp.eq.s32.totalorder %s13, 0
      %p108 = por %p106, %p107
      %p109 = scmp.ne.s32.totalorder %s98, %s101
      %p110 = scmp.eq.s32.totalorder %s18, 1
      %p111 = por %p109, %p110
      %p112 = scmp.ne.s32.totalorder %s101, %s102
      %p113 = scmp.eq.s32.totalorder %s18, 0
      %p114 = por %p112, %p113
      %p115 = scmp.ne.s32.totalorder %s101, %s102
      %p116 = scmp.eq.s32.totalorder %s19, 1
      %p117 = por %p115, %p116
      %p119 = scmp.ne.s32.totalorder %s102, %s118
      %p120 = scmp.eq.s32.totalorder %s19, 0
      %p121 = por %p119, %p120
      %s122 = ssub.s32 %s21, %s35
      %p123 = scmp.eq.s32.totalorder %s122, 0
      %s125 = sadd.s32 %s124, 1
      %s126 = scalar_select %p123, %s124, %s125
      %p129 = pneg %p123
      %p130 = scmp.eq.s32.totalorder %s13, 1
      %p131 = por %p129, %p130
      %p132 = scmp.ne.s32.totalorder %s124, %s127
      %p133 = scmp.eq.s32.totalorder %s13, 0
      %p134 = por %p132, %p133
      %p135 = scmp.ne.s32.totalorder %s124, %s127
      %p136 = scmp.eq.s32.totalorder %s18, 1
      %p137 = por %p135, %p136
      %p138 = scmp.ne.s32.totalorder %s127, %s128
      %p139 = scmp.eq.s32.totalorder %s18, 0
      %p140 = por %p138, %p139
      %p141 = scmp.ne.s32.totalorder %s127, %s128
      %p142 = scmp.eq.s32.totalorder %s19, 1
      %p143 = por %p141, %p142
      %p145 = scmp.ne.s32.totalorder %s128, %s144
      %p146 = scmp.eq.s32.totalorder %s19, 0
      %p147 = por %p145, %p146
      %s148 = ssub.s32 %s20, %s39
      %s149 = ssub.s32 %s21, %s35
      %s150 = sor.u32 %s148, %s149
      %p151 = scmp.eq.s32.totalorder %s150, 0
      %s153 = sadd.s32 %s152, 1
      %s154 = scalar_select %p151, %s152, %s153
      %p157 = pneg %p151
      %p158 = scmp.eq.s32.totalorder %s13, 1
      %p159 = por %p157, %p158
      %p160 = scmp.ne.s32.totalorder %s152, %s155
      %p161 = scmp.eq.s32.totalorder %s13, 0
      %p162 = por %p160, %p161
      %p163 = scmp.ne.s32.totalorder %s152, %s155
      %p164 = scmp.eq.s32.totalorder %s18, 1
      %p165 = por %p163, %p164
      %p166 = scmp.ne.s32.totalorder %s155, %s156
      %p167 = scmp.eq.s32.totalorder %s18, 0
      %p168 = por %p166, %p167
      %p169 = scmp.ne.s32.totalorder %s155, %s156
      %p170 = scmp.eq.s32.totalorder %s19, 1
      %p171 = por %p169, %p170
      %p173 = scmp.ne.s32.totalorder %s156, %s172
      %p174 = scmp.eq.s32.totalorder %s19, 0
      %p175 = por %p173, %p174
      %p176 = scmp.le.s32.totalorder 1, %s13
      %p177 = scmp.lt.s32.totalorder %s13, 3
      %p178 = pnand %p176, %p177
      %p179 = pneg %p178
      // Predicated region
      $region9: #{forward.3} parent=5 // pred_check
        _
      $region10: #{forward.3} parent=5 // pred_check_branch
        %181 = sbr.rel (%p178) target = $region12
      $region11: #{forward.3} parent=5 // pred_region
        %s182 = ssub.s32 %s13, 1
        // Predicated region
        $region13: #{forward.3} parent=11 // pred_check
          %p183 = pneg %p88
        $region14: #{forward.3} parent=11 // pred_check_branch
          %185 = sbr.rel (%p183) target = $region16
        $region15: #{forward.3} parent=11 // pred_region
          %s186 = smul.u32 48, %s25
          %p187 = scmp.lt.s32.totalorder %s186, 47
          %s188 = scalar_select %p187, %s186, 47
          %p189 = scmp.lt.s32.totalorder %s24, 0
          %s190 = scalar_select %p189, %s24, 0
          %s191 = sadd.s32 %s190, %s188
          %s192 = smul.addr %s191, 4
          %s193 = scalar_lea.vmem %s1, %s192
          %s194 = smul.u32 48, %s25
        $region16: #{forward.3} parent=11 // pred_fallthru
          _
        // Predicated region
        $region17: #{forward.3} parent=11 // pred_check
          %p195 = pneg %p114
        $region18: #{forward.3} parent=11 // pred_check_branch
          %197 = sbr.rel (%p195) target = $region20
        $region19: #{forward.3} parent=11 // pred_region
          %p198 = scmp.lt.s32.totalorder %s24, 0
          %s199 = scalar_select %p198, %s24, 0
          %s200 = scalar_lea.vmem %s2, %s199
        $region20: #{forward.3} parent=11 // pred_fallthru
          _
        // Predicated region
        $region21: #{forward.3} parent=11 // pred_check
          %p201 = pneg %p140
        $region22: #{forward.3} parent=11 // pred_check_branch
          %203 = sbr.rel (%p201) target = $region24
        $region23: #{forward.3} parent=11 // pred_region
          %p204 = scmp.lt.s32.totalorder %s24, 0
          %s205 = scalar_select %p204, %s24, 0
          %s206 = scalar_lea.vmem %s3, %s205
        $region24: #{forward.3} parent=11 // pred_fallthru
          _
      $region12: #{forward.3} parent=5 // pred_fallthru
        _
      %p207 = scmp.lt.s32.totalorder %s13, 2
      // Predicated region
      $region25: #{forward.3} parent=5 // pred_check
        %p208 = pneg %p207
      $region26: #{forward.3} parent=5 // pred_check_branch
        %210 = sbr.rel (%p208) target = $region28
      $region27: #{forward.3} parent=5 // pred_region
        // Predicated region
        $region29: #{forward.3} parent=27 // pred_check
          %p211 = pneg %p54
        $region30: #{forward.3} parent=27 // pred_check_branch
          %213 = sbr.rel (%p211) target = $region32
        $region31: #{forward.3} parent=27 // pred_region
          %s214 = smul.u32 32, %s20
          %s215 = smul.u32 3, %s22
          %p216 = scmp.lt.s32.totalorder %s214, 63
          %s217 = scalar_select %p216, %s214, 63
          %p218 = scmp.lt.s32.totalorder %s215, 2
          %s219 = scalar_select %p218, %s215, 2
          %s220 = smul.addr %s217, 3
          %s221 = sadd.s32 %s219, %s220
          %s222 = smul.addr %s221, 4
          %s223 = scalar_lea.vmem %s0, %s222
          %s224 = smul.u32 32, %s20
          %s225 = smul.u32 3, %s22
        $region32: #{forward.3} parent=27 // pred_fallthru
          _
      $region28: #{forward.3} parent=5 // pred_fallthru
        _
      %p226 = scmp.le.s32.totalorder 1, %s13
      %p227 = scmp.lt.s32.totalorder %s13, 3
      %p228 = pnand %p226, %p227
      %p229 = pneg %p228
      // Predicated region
      $region33: #{forward.3} parent=5 // pred_check
        _
      $region34: #{forward.3} parent=5 // pred_check_branch
        %231 = sbr.rel (%p228) target = $region36
      $region35: #{forward.3} parent=5 // pred_region
        %s232 = ssub.s32 %s13, 1
        %s233 = smul.u32 32, %s23
        %s234 = smul.u32 3, %s25
        %p235 = scmp.lt.s32.totalorder %s233, 63
        %s236 = scalar_select %p235, %s233, 63
        %p237 = scmp.lt.s32.totalorder %s234, 2
        %s238 = scalar_select %p237, %s234, 2
        %s239 = smul.addr %s236, 3
        %s240 = sadd.s32 %s238, %s239
        %s241 = smul.addr %s240, 4
        %s242 = scalar_lea.vmem %s0, %s241
        %p243 = pneg %p60
        %p244 = pneg %p57
        %s245 = smul.u32 48, %s25
        %p246 = scmp.lt.s32.totalorder %s245, 47
        %s247 = scalar_select %p246, %s245, 47
        %p248 = scmp.lt.s32.totalorder %s24, 0
        %s249 = scalar_select %p248, %s24, 0
        %s250 = sadd.s32 %s249, %s247
        %s251 = smul.addr %s250, 4
        %s252 = scalar_lea.vmem %s1, %s251
        %p253 = pneg %p88
        %p254 = pneg %p85
        %p255 = scmp.lt.s32.totalorder %s24, 0
        %s256 = scalar_select %p255, %s24, 0
        %s257 = scalar_lea.vmem %s2, %s256
        %p258 = pneg %p114
        %p259 = pneg %p111
        %p260 = scmp.lt.s32.totalorder %s24, 0
        %s261 = scalar_select %p260, %s24, 0
        %s262 = scalar_lea.vmem %s3, %s261
        %p263 = pneg %p140
        %p264 = pneg %p137
        %p265 = pneg %p168
        %p266 = pneg %p165
        %s267 = sand.u32 %s155, 1
        %s268 = scalar_lea.sflag [#allocation4], %s267
        %s269 = sand.u32 %s155, 1
        %s270 = smul.addr %s269, 256
        %s271 = scalar_lea.vmem [#allocation3], %s270
        %s272 = smul.u32 32, %s23
        %s273 = smul.u32 3, %s25
        %p274 = scmp.lt.s32.totalorder %s272, 63
        %s275 = scalar_select %p274, %s272, 63
        %p276 = scmp.lt.s32.totalorder %s273, 2
        %s277 = scalar_select %p276, %s273, 2
        %s278 = smul.addr %s275, 3
        %s279 = sadd.s32 %s277, %s278
        %s280 = smul.addr %s279, 4
        %s281 = scalar_lea.vmem %s0, %s280
        %s282 = smul.u32 32, %s23
        %s283 = smul.u32 3, %s25
        %s284 = smul.u32 48, %s25
        %p285 = scmp.lt.s32.totalorder %s284, 47
        %s286 = scalar_select %p285, %s284, 47
        %p287 = scmp.lt.s32.totalorder %s24, 0
        %s288 = scalar_select %p287, %s24, 0
        %s289 = sadd.s32 %s288, %s286
        %s290 = smul.addr %s289, 4
        %s291 = scalar_lea.vmem %s1, %s290
        %s292 = smul.u32 48, %s25
        %p293 = scmp.lt.s32.totalorder %s24, 0
        %s294 = scalar_select %p293, %s24, 0
        %s295 = scalar_lea.vmem %s2, %s294
        %p296 = scmp.lt.s32.totalorder %s24, 0
        %s297 = scalar_select %p296, %s24, 0
        %s298 = scalar_lea.vmem %s3, %s297
        %s299 = smul.u32 32, %s23
        %p301 = scmp.eq.s32.totalorder %s25, 0
        // Predicated region
        $region37: #{forward.3} parent=35 // pred_check
          %p302 = pneg %p301
        $region38: #{forward.3} parent=35 // pred_check_branch
          %304 = sbr.rel (%p302) target = $region40
        $region39: #{forward.3} parent=35 // pred_region
          %305 = vst [vmem:[#allocation2] sm:$0xff] 0.0
          %306 = vst [vmem:[#allocation2 + $0x8] sm:$0xff] 0.0
          %307 = vst [vmem:[#allocation2 + $0x10] sm:$0xff] 0.0
          %308 = vst [vmem:[#allocation2 + $0x18] sm:$0xff] 0.0
          %309 = vst [vmem:[#allocation2 + $0x20] sm:$0xff] 0.0
          %310 = vst [vmem:[#allocation2 + $0x28] sm:$0xff] 0.0
          %311 = vst [vmem:[#allocation2 + $0x30] sm:$0xff] 0.0
          %312 = vst [vmem:[#allocation2 + $0x38] sm:$0xff] 0.0
          %313 = vst [vmem:[#allocation2 + $0x40] sm:$0xff] 0.0
          %314 = vst [vmem:[#allocation2 + $0x48] sm:$0xff] 0.0
          %315 = vst [vmem:[#allocation2 + $0x50] sm:$0xff] 0.0
          %316 = vst [vmem:[#allocation2 + $0x58] sm:$0xff] 0.0
          %317 = vst [vmem:[#allocation2 + $0x60] sm:$0xff] 0.0
          %318 = vst [vmem:[#allocation2 + $0x68] sm:$0xff] 0.0
          %319 = vst [vmem:[#allocation2 + $0x70] sm:$0xff] 0.0
          %320 = vst [vmem:[#allocation2 + $0x78] sm:$0xff] 0.0
          %321 = vst [vmem:[#allocation2 + $0x80] sm:$0xff] 0.0
          %322 = vst [vmem:[#allocation2 + $0x88] sm:$0xff] 0.0
          %323 = vst [vmem:[#allocation2 + $0x90] sm:$0xff] 0.0
          %324 = vst [vmem:[#allocation2 + $0x98] sm:$0xff] 0.0
          %325 = vst [vmem:[#allocation2 + $0xa0] sm:$0xff] 0.0
          %326 = vst [vmem:[#allocation2 + $0xa8] sm:$0xff] 0.0
          %327 = vst [vmem:[#allocation2 + $0xb0] sm:$0xff] 0.0
          %328 = vst [vmem:[#allocation2 + $0xb8] sm:$0xff] 0.0
          %329 = vst [vmem:[#allocation2 + $0xc0] sm:$0xff] 0.0
          %330 = vst [vmem:[#allocation2 + $0xc8] sm:$0xff] 0.0
          %331 = vst [vmem:[#allocation2 + $0xd0] sm:$0xff] 0.0
          %332 = vst [vmem:[#allocation2 + $0xd8] sm:$0xff] 0.0
          %333 = vst [vmem:[#allocation2 + $0xe0] sm:$0xff] 0.0
          %334 = vst [vmem:[#allocation2 + $0xe8] sm:$0xff] 0.0
          %335 = vst [vmem:[#allocation2 + $0xf0] sm:$0xff] 0.0
          %336 = vst [vmem:[#allocation2 + $0xf8] sm:$0xff] 0.0
        $region40: #{forward.3} parent=35 // pred_fallthru
          _
        %v337 = vld [vmem:[#allocation2] sm:$0xff]
        %v338 = vld [vmem:[#allocation2 + $0x8] sm:$0xff]
        %v339 = vld [vmem:[#allocation2 + $0x10] sm:$0xff]
        %v340 = vld [vmem:[#allocation2 + $0x18] sm:$0xff]
        %v341 = vld [vmem:[#allocation2 + $0x20] sm:$0xff]
        %v342 = vld [vmem:[#allocation2 + $0x28] sm:$0xff]
        %v343 = vld [vmem:[#allocation2 + $0x30] sm:$0xff]
        %v344 = vld [vmem:[#allocation2 + $0x38] sm:$0xff]
        %v345 = vld [vmem:[#allocation2 + $0x40] sm:$0xff]
        %v346 = vld [vmem:[#allocation2 + $0x48] sm:$0xff]
        %v347 = vld [vmem:[#allocation2 + $0x50] sm:$0xff]
        %v348 = vld [vmem:[#allocation2 + $0x58] sm:$0xff]
        %v349 = vld [vmem:[#allocation2 + $0x60] sm:$0xff]
        %v350 = vld [vmem:[#allocation2 + $0x68] sm:$0xff]
        %v351 = vld [vmem:[#allocation2 + $0x70] sm:$0xff]
        %v352 = vld [vmem:[#allocation2 + $0x78] sm:$0xff]
        %v353 = vld [vmem:[#allocation2 + $0x80] sm:$0xff]
        %v354 = vld [vmem:[#allocation2 + $0x88] sm:$0xff]
        %v355 = vld [vmem:[#allocation2 + $0x90] sm:$0xff]
        %v356 = vld [vmem:[#allocation2 + $0x98] sm:$0xff]
        %v357 = vld [vmem:[#allocation2 + $0xa0] sm:$0xff]
        %v358 = vld [vmem:[#allocation2 + $0xa8] sm:$0xff]
        %v359 = vld [vmem:[#allocation2 + $0xb0] sm:$0xff]
        %v360 = vld [vmem:[#allocation2 + $0xb8] sm:$0xff]
        %v361 = vld [vmem:[#allocation2 + $0xc0] sm:$0xff]
        %v362 = vld [vmem:[#allocation2 + $0xc8] sm:$0xff]
        %v363 = vld [vmem:[#allocation2 + $0xd0] sm:$0xff]
        %v364 = vld [vmem:[#allocation2 + $0xd8] sm:$0xff]
        %v365 = vld [vmem:[#allocation2 + $0xe0] sm:$0xff]
        %v366 = vld [vmem:[#allocation2 + $0xe8] sm:$0xff]
        %v367 = vld [vmem:[#allocation2 + $0xf0] sm:$0xff]
        %v368 = vld [vmem:[#allocation2 + $0xf8] sm:$0xff]
        %v369 = vld [vmem:[%s281] sm:$0xff]
        %v370 = vld [vmem:[%s281 + $0x8] sm:$0xf]
        %v371 = vld [vmem:[%s281 + $0xc] sm:$0xff]
        %v372 = vld [vmem:[%s281 + $0x14] sm:$0xf]
        %v373 = vld [vmem:[%s281 + $0x18] sm:$0xff]
        %v374 = vld [vmem:[%s281 + $0x20] sm:$0xf]
        %v375 = vld [vmem:[%s281 + $0x24] sm:$0xff]
        %v376 = vld [vmem:[%s281 + $0x2c] sm:$0xf]
        %v377 = vld [vmem:[%s281 + $0x30] sm:$0xff]
        %v378 = vld [vmem:[%s281 + $0x38] sm:$0xf]
        %v379 = vld [vmem:[%s281 + $0x3c] sm:$0xff]
        %v380 = vld [vmem:[%s281 + $0x44] sm:$0xf]
        %v381 = vld [vmem:[%s281 + $0x48] sm:$0xff]
        %v382 = vld [vmem:[%s281 + $0x50] sm:$0xf]
        %v383 = vld [vmem:[%s281 + $0x54] sm:$0xff]
        %v384 = vld [vmem:[%s281 + $0x5c] sm:$0xf]
        %v385 = vld [vmem:[%s281 + $0x60] sm:$0xff]
        %v386 = vld [vmem:[%s281 + $0x68] sm:$0xf]
        %v387 = vld [vmem:[%s281 + $0x6c] sm:$0xff]
        %v388 = vld [vmem:[%s281 + $0x74] sm:$0xf]
        %v389 = vld [vmem:[%s281 + $0x78] sm:$0xff]
        %v390 = vld [vmem:[%s281 + $0x80] sm:$0xf]
        %v391 = vld [vmem:[%s281 + $0x84] sm:$0xff]
        %v392 = vld [vmem:[%s281 + $0x8c] sm:$0xf]
        %v393 = vld [vmem:[%s281 + $0x90] sm:$0xff]
        %v394 = vld [vmem:[%s281 + $0x98] sm:$0xf]
        %v395 = vld [vmem:[%s281 + $0x9c] sm:$0xff]
        %v396 = vld [vmem:[%s281 + $0xa4] sm:$0xf]
        %v397 = vld [vmem:[%s281 + $0xa8] sm:$0xff]
        %v398 = vld [vmem:[%s281 + $0xb0] sm:$0xf]
        %v399 = vld [vmem:[%s281 + $0xb4] sm:$0xff]
        %v400 = vld [vmem:[%s281 + $0xbc] sm:$0xf]
        %v401 = vld [vmem:[%s281 + $0xc0] sm:$0xff]
        %v402 = vld [vmem:[%s281 + $0xc8] sm:$0xf]
        %v403 = vld [vmem:[%s281 + $0xcc] sm:$0xff]
        %v404 = vld [vmem:[%s281 + $0xd4] sm:$0xf]
        %v405 = vld [vmem:[%s281 + $0xd8] sm:$0xff]
        %v406 = vld [vmem:[%s281 + $0xe0] sm:$0xf]
        %v407 = vld [vmem:[%s281 + $0xe4] sm:$0xff]
        %v408 = vld [vmem:[%s281 + $0xec] sm:$0xf]
        %v409 = vld [vmem:[%s281 + $0xf0] sm:$0xff]
        %v410 = vld [vmem:[%s281 + $0xf8] sm:$0xf]
        %v411 = vld [vmem:[%s281 + $0xfc] sm:$0xff]
        %v412 = vld [vmem:[%s281 + $0x104] sm:$0xf]
        %v413 = vld [vmem:[%s281 + $0x108] sm:$0xff]
        %v414 = vld [vmem:[%s281 + $0x110] sm:$0xf]
        %v415 = vld [vmem:[%s281 + $0x114] sm:$0xff]
        %v416 = vld [vmem:[%s281 + $0x11c] sm:$0xf]
        %v417 = vld [vmem:[%s281 + $0x120] sm:$0xff]
        %v418 = vld [vmem:[%s281 + $0x128] sm:$0xf]
        %v419 = vld [vmem:[%s281 + $0x12c] sm:$0xff]
        %v420 = vld [vmem:[%s281 + $0x134] sm:$0xf]
        %v421 = vld [vmem:[%s281 + $0x138] sm:$0xff]
        %v422 = vld [vmem:[%s281 + $0x140] sm:$0xf]
        %v423 = vld [vmem:[%s281 + $0x144] sm:$0xff]
        %v424 = vld [vmem:[%s281 + $0x14c] sm:$0xf]
        %v425 = vld [vmem:[%s281 + $0x150] sm:$0xff]
        %v426 = vld [vmem:[%s281 + $0x158] sm:$0xf]
        %v427 = vld [vmem:[%s281 + $0x15c] sm:$0xff]
        %v428 = vld [vmem:[%s281 + $0x164] sm:$0xf]
        %v429 = vld [vmem:[%s281 + $0x168] sm:$0xff]
        %v430 = vld [vmem:[%s281 + $0x170] sm:$0xf]
        %v431 = vld [vmem:[%s281 + $0x174] sm:$0xff]
        %v432 = vld [vmem:[%s281 + $0x17c] sm:$0xf]
        %v433 = vld [vmem:[%s291] sm:$0xf]
        %v434 = vld [vmem:[%s291 + $0x4] sm:$0xf]
        %v435 = vld [vmem:[%s291 + $0x8] sm:$0xf]
        %v436 = vld [vmem:[%s291 + $0xc] sm:$0xf]
        %v437 = vld [vmem:[%s291 + $0x10] sm:$0xf]
        %v438 = vld [vmem:[%s291 + $0x14] sm:$0xf]
        %v439 = vld [vmem:[%s291 + $0x18] sm:$0xf]
        %v440 = vld [vmem:[%s291 + $0x1c] sm:$0xf]
        %v441 = vld [vmem:[%s291 + $0x20] sm:$0xf]
        %v442 = vld [vmem:[%s291 + $0x24] sm:$0xf]
        %v443 = vld [vmem:[%s291 + $0x28] sm:$0xf]
        %v444 = vld [vmem:[%s291 + $0x2c] sm:$0xf]
        %v445 = vld [vmem:[%s291 + $0x30] sm:$0xf]
        %v446 = vld [vmem:[%s291 + $0x34] sm:$0xf]
        %v447 = vld [vmem:[%s291 + $0x38] sm:$0xf]
        %v448 = vld [vmem:[%s291 + $0x3c] sm:$0xf]
        %v449 = vld [vmem:[%s291 + $0x40] sm:$0xf]
        %v450 = vld [vmem:[%s291 + $0x44] sm:$0xf]
        %v451 = vld [vmem:[%s291 + $0x48] sm:$0xf]
        %v452 = vld [vmem:[%s291 + $0x4c] sm:$0xf]
        %v453 = vld [vmem:[%s291 + $0x50] sm:$0xf]
        %v454 = vld [vmem:[%s291 + $0x54] sm:$0xf]
        %v455 = vld [vmem:[%s291 + $0x58] sm:$0xf]
        %v456 = vld [vmem:[%s291 + $0x5c] sm:$0xf]
        %v457 = vld [vmem:[%s291 + $0x60] sm:$0xf]
        %v458 = vld [vmem:[%s291 + $0x64] sm:$0xf]
        %v459 = vld [vmem:[%s291 + $0x68] sm:$0xf]
        %v460 = vld [vmem:[%s291 + $0x6c] sm:$0xf]
        %v461 = vld [vmem:[%s291 + $0x70] sm:$0xf]
        %v462 = vld [vmem:[%s291 + $0x74] sm:$0xf]
        %v463 = vld [vmem:[%s291 + $0x78] sm:$0xf]
        %v464 = vld [vmem:[%s291 + $0x7c] sm:$0xf]
        %v465 = vld [vmem:[%s291 + $0x80] sm:$0xf]
        %v466 = vld [vmem:[%s291 + $0x84] sm:$0xf]
        %v467 = vld [vmem:[%s291 + $0x88] sm:$0xf]
        %v468 = vld [vmem:[%s291 + $0x8c] sm:$0xf]
        %v469 = vld [vmem:[%s291 + $0x90] sm:$0xf]
        %v470 = vld [vmem:[%s291 + $0x94] sm:$0xf]
        %v471 = vld [vmem:[%s291 + $0x98] sm:$0xf]
        %v472 = vld [vmem:[%s291 + $0x9c] sm:$0xf]
        %v473 = vld [vmem:[%s291 + $0xa0] sm:$0xf]
        %v474 = vld [vmem:[%s291 + $0xa4] sm:$0xf]
        %v475 = vld [vmem:[%s291 + $0xa8] sm:$0xf]
        %v476 = vld [vmem:[%s291 + $0xac] sm:$0xf]
        %v477 = vld [vmem:[%s291 + $0xb0] sm:$0xf]
        %v478 = vld [vmem:[%s291 + $0xb4] sm:$0xf]
        %v479 = vld [vmem:[%s291 + $0xb8] sm:$0xf]
        %v480 = vld [vmem:[%s291 + $0xbc] sm:$0xf]
        %v545 = vunpack.c.l.b16 %v369
        %v546 = vunpack.c.h.b16 %v369
        %v547 = vunpack.c.l.b16 %v370
        %v548 = vunpack.c.l.b16 %v371
        %v549 = vunpack.c.h.b16 %v371
        %v550 = vunpack.c.l.b16 %v372
        %v551 = vunpack.c.l.b16 %v373
        %v552 = vunpack.c.h.b16 %v373
        %v553 = vunpack.c.l.b16 %v374
        %v554 = vunpack.c.l.b16 %v375
        %v555 = vunpack.c.h.b16 %v375
        %v556 = vunpack.c.l.b16 %v376
        %v557 = vunpack.c.l.b16 %v377
        %v558 = vunpack.c.h.b16 %v377
        %v559 = vunpack.c.l.b16 %v378
        %v560 = vunpack.c.l.b16 %v379
        %v561 = vunpack.c.h.b16 %v379
        %v562 = vunpack.c.l.b16 %v380
        %v563 = vunpack.c.l.b16 %v381
        %v564 = vunpack.c.h.b16 %v381
        %v565 = vunpack.c.l.b16 %v382
        %v566 = vunpack.c.l.b16 %v383
        %v567 = vunpack.c.h.b16 %v383
        %v568 = vunpack.c.l.b16 %v384
        %v569 = vunpack.c.l.b16 %v385
        %v570 = vunpack.c.h.b16 %v385
        %v571 = vunpack.c.l.b16 %v386
        %v572 = vunpack.c.l.b16 %v387
        %v573 = vunpack.c.h.b16 %v387
        %v574 = vunpack.c.l.b16 %v388
        %v575 = vunpack.c.l.b16 %v389
        %v576 = vunpack.c.h.b16 %v389
        %v577 = vunpack.c.l.b16 %v390
        %v578 = vunpack.c.l.b16 %v391
        %v579 = vunpack.c.h.b16 %v391
        %v580 = vunpack.c.l.b16 %v392
        %v581 = vunpack.c.l.b16 %v393
        %v582 = vunpack.c.h.b16 %v393
        %v583 = vunpack.c.l.b16 %v394
        %v584 = vunpack.c.l.b16 %v395
        %v585 = vunpack.c.h.b16 %v395
        %v586 = vunpack.c.l.b16 %v396
        %v587 = vunpack.c.l.b16 %v397
        %v588 = vunpack.c.h.b16 %v397
        %v589 = vunpack.c.l.b16 %v398
        %v590 = vunpack.c.l.b16 %v399
        %v591 = vunpack.c.h.b16 %v399
        %v592 = vunpack.c.l.b16 %v400
        %v593 = vunpack.c.l.b16 %v401
        %v594 = vunpack.c.h.b16 %v401
        %v595 = vunpack.c.l.b16 %v402
        %v596 = vunpack.c.l.b16 %v403
        %v597 = vunpack.c.h.b16 %v403
        %v598 = vunpack.c.l.b16 %v404
        %v599 = vunpack.c.l.b16 %v405
        %v600 = vunpack.c.h.b16 %v405
        %v601 = vunpack.c.l.b16 %v406
        %v602 = vunpack.c.l.b16 %v407
        %v603 = vunpack.c.h.b16 %v407
        %v604 = vunpack.c.l.b16 %v408
        %v605 = vunpack.c.l.b16 %v409
        %v606 = vunpack.c.h.b16 %v409
        %v607 = vunpack.c.l.b16 %v410
        %v608 = vunpack.c.l.b16 %v411
        %v609 = vunpack.c.h.b16 %v411
        %v610 = vunpack.c.l.b16 %v412
        %v611 = vunpack.c.l.b16 %v413
        %v612 = vunpack.c.h.b16 %v413
        %v613 = vunpack.c.l.b16 %v414
        %v614 = vunpack.c.l.b16 %v415
        %v615 = vunpack.c.h.b16 %v415
        %v616 = vunpack.c.l.b16 %v416
        %v617 = vunpack.c.l.b16 %v417
        %v618 = vunpack.c.h.b16 %v417
        %v619 = vunpack.c.l.b16 %v418
        %v620 = vunpack.c.l.b16 %v419
        %v621 = vunpack.c.h.b16 %v419
        %v622 = vunpack.c.l.b16 %v420
        %v623 = vunpack.c.l.b16 %v421
        %v624 = vunpack.c.h.b16 %v421
        %v625 = vunpack.c.l.b16 %v422
        %v626 = vunpack.c.l.b16 %v423
        %v627 = vunpack.c.h.b16 %v423
        %v628 = vunpack.c.l.b16 %v424
        %v629 = vunpack.c.l.b16 %v425
        %v630 = vunpack.c.h.b16 %v425
        %v631 = vunpack.c.l.b16 %v426
        %v632 = vunpack.c.l.b16 %v427
        %v633 = vunpack.c.h.b16 %v427
        %v634 = vunpack.c.l.b16 %v428
        %v635 = vunpack.c.l.b16 %v429
        %v636 = vunpack.c.h.b16 %v429
        %v637 = vunpack.c.l.b16 %v430
        %v638 = vunpack.c.l.b16 %v431
        %v639 = vunpack.c.h.b16 %v431
        %v640 = vunpack.c.l.b16 %v432
        %v641 = vpack.c.b16 %v548, %v545
        %v642 = vpack.c.b16 %v549, %v546
        %v643 = vpack.c.b16 %v550, %v547
        %v644 = vpack.c.b16 %v554, %v551
        %v645 = vpack.c.b16 %v555, %v552
        %v646 = vpack.c.b16 %v556, %v553
        %v647 = vpack.c.b16 %v560, %v557
        %v648 = vpack.c.b16 %v561, %v558
        %v649 = vpack.c.b16 %v562, %v559
        %v650 = vpack.c.b16 %v566, %v563
        %v651 = vpack.c.b16 %v567, %v564
        %v652 = vpack.c.b16 %v568, %v565
        %v653 = vpack.c.b16 %v572, %v569
        %v654 = vpack.c.b16 %v573, %v570
        %v655 = vpack.c.b16 %v574, %v571
        %v656 = vpack.c.b16 %v578, %v575
        %v657 = vpack.c.b16 %v579, %v576
        %v658 = vpack.c.b16 %v580, %v577
        %v659 = vpack.c.b16 %v584, %v581
        %v660 = vpack.c.b16 %v585, %v582
        %v661 = vpack.c.b16 %v586, %v583
        %v662 = vpack.c.b16 %v590, %v587
        %v663 = vpack.c.b16 %v591, %v588
        %v664 = vpack.c.b16 %v592, %v589
        %v665 = vpack.c.b16 %v596, %v593
        %v666 = vpack.c.b16 %v597, %v594
        %v667 = vpack.c.b16 %v598, %v595
        %v668 = vpack.c.b16 %v602, %v599
        %v669 = vpack.c.b16 %v603, %v600
        %v670 = vpack.c.b16 %v604, %v601
        %v671 = vpack.c.b16 %v608, %v605
        %v672 = vpack.c.b16 %v609, %v606
        %v673 = vpack.c.b16 %v610, %v607
        %v674 = vpack.c.b16 %v614, %v611
        %v675 = vpack.c.b16 %v615, %v612
        %v676 = vpack.c.b16 %v616, %v613
        %v677 = vpack.c.b16 %v620, %v617
        %v678 = vpack.c.b16 %v621, %v618
        %v679 = vpack.c.b16 %v622, %v619
        %v680 = vpack.c.b16 %v626, %v623
        %v681 = vpack.c.b16 %v627, %v624
        %v682 = vpack.c.b16 %v628, %v625
        %v683 = vpack.c.b16 %v632, %v629
        %v684 = vpack.c.b16 %v633, %v630
        %v685 = vpack.c.b16 %v634, %v631
        %v686 = vpack.c.b16 %v638, %v635
        %v687 = vpack.c.b16 %v639, %v636
        %v688 = vpack.c.b16 %v640, %v637
        %v785 = vunpack.c.l.b16 %v433
        %v786 = vunpack.c.l.b16 %v434
        %v787 = vunpack.c.l.b16 %v435
        %v788 = vunpack.c.l.b16 %v436
        %v789 = vunpack.c.l.b16 %v437
        %v790 = vunpack.c.l.b16 %v438
        %v791 = vunpack.c.l.b16 %v439
        %v792 = vunpack.c.l.b16 %v440
        %v793 = vunpack.c.l.b16 %v441
        %v794 = vunpack.c.l.b16 %v442
        %v795 = vunpack.c.l.b16 %v443
        %v796 = vunpack.c.l.b16 %v444
        %v797 = vunpack.c.l.b16 %v445
        %v798 = vunpack.c.l.b16 %v446
        %v799 = vunpack.c.l.b16 %v447
        %v800 = vunpack.c.l.b16 %v448
        %v801 = vunpack.c.l.b16 %v449
        %v802 = vunpack.c.l.b16 %v450
        %v803 = vunpack.c.l.b16 %v451
        %v804 = vunpack.c.l.b16 %v452
        %v805 = vunpack.c.l.b16 %v453
        %v806 = vunpack.c.l.b16 %v454
        %v807 = vunpack.c.l.b16 %v455
        %v808 = vunpack.c.l.b16 %v456
        %v809 = vunpack.c.l.b16 %v457
        %v810 = vunpack.c.l.b16 %v458
        %v811 = vunpack.c.l.b16 %v459
        %v812 = vunpack.c.l.b16 %v460
        %v813 = vunpack.c.l.b16 %v461
        %v814 = vunpack.c.l.b16 %v462
        %v815 = vunpack.c.l.b16 %v463
        %v816 = vunpack.c.l.b16 %v464
        %v817 = vunpack.c.l.b16 %v465
        %v818 = vunpack.c.l.b16 %v466
        %v819 = vunpack.c.l.b16 %v467
        %v820 = vunpack.c.l.b16 %v468
        %v821 = vunpack.c.l.b16 %v469
        %v822 = vunpack.c.l.b16 %v470
        %v823 = vunpack.c.l.b16 %v471
        %v824 = vunpack.c.l.b16 %v472
        %v825 = vunpack.c.l.b16 %v473
        %v826 = vunpack.c.l.b16 %v474
        %v827 = vunpack.c.l.b16 %v475
        %v828 = vunpack.c.l.b16 %v476
        %v829 = vunpack.c.l.b16 %v477
        %v830 = vunpack.c.l.b16 %v478
        %v831 = vunpack.c.l.b16 %v479
        %v832 = vunpack.c.l.b16 %v480
        %v833 = vpack.c.b16 %v786, %v785
        %v834 = vpack.c.b16 %v788, %v787
        %v835 = vpack.c.b16 %v790, %v789
        %v836 = vpack.c.b16 %v792, %v791
        %v837 = vpack.c.b16 %v794, %v793
        %v838 = vpack.c.b16 %v796, %v795
        %v839 = vpack.c.b16 %v798, %v797
        %v840 = vpack.c.b16 %v800, %v799
        %v841 = vpack.c.b16 %v802, %v801
        %v842 = vpack.c.b16 %v804, %v803
        %v843 = vpack.c.b16 %v806, %v805
        %v844 = vpack.c.b16 %v808, %v807
        %v845 = vpack.c.b16 %v810, %v809
        %v846 = vpack.c.b16 %v812, %v811
        %v847 = vpack.c.b16 %v814, %v813
        %v848 = vpack.c.b16 %v816, %v815
        %v849 = vpack.c.b16 %v818, %v817
        %v850 = vpack.c.b16 %v820, %v819
        %v851 = vpack.c.b16 %v822, %v821
        %v852 = vpack.c.b16 %v824, %v823
        %v853 = vpack.c.b16 %v826, %v825
        %v854 = vpack.c.b16 %v828, %v827
        %v855 = vpack.c.b16 %v830, %v829
        %v856 = vpack.c.b16 %v832, %v831
        %881 = vmatprep.subr.bf16.mxu0 0
        %882 = vmatpush1.bf16.msra.mxu0 %v840
        %883 = vmatprep.subr.bf16.mxu0 0
        %884 = vmatpush1.bf16.msra.mxu0 %v839
        %885 = vmatprep.subr.bf16.mxu0 0
        %886 = vmatpush1.bf16.msra.mxu0 %v838
        %887 = vmatprep.subr.bf16.mxu0 0
        %888 = vmatpush1.bf16.msra.mxu0 %v837
        %889 = vmatprep.subr.bf16.mxu0 0
        %890 = vmatpush1.bf16.msra.mxu0 %v836
        %891 = vmatprep.subr.bf16.mxu0 0
        %892 = vmatpush1.bf16.msra.mxu0 %v835
        %893 = vmatprep.subr.bf16.mxu0 0
        %894 = vmatpush1.bf16.msra.mxu0 %v834
        %895 = vmatprep.subr.bf16.mxu0 0
        %896 = vmatpush1.bf16.msra.mxu0 %v833
        %897 = vmatprep.subr.bf16.mxu0 0
        %898 = vmatpush2.bf16.msra.mxu0 %v848
        %899 = vmatprep.subr.bf16.mxu0 0
        %900 = vmatpush2.bf16.msra.mxu0 %v847
        %901 = vmatprep.subr.bf16.mxu0 0
        %902 = vmatpush2.bf16.msra.mxu0 %v846
        %903 = vmatprep.subr.bf16.mxu0 0
        %904 = vmatpush2.bf16.msra.mxu0 %v845
        %905 = vmatprep.subr.bf16.mxu0 0
        %906 = vmatpush2.bf16.msra.mxu0 %v844
        %907 = vmatprep.subr.bf16.mxu0 0
        %908 = vmatpush2.bf16.msra.mxu0 %v843
        %909 = vmatprep.subr.bf16.mxu0 0
        %910 = vmatpush2.bf16.msra.mxu0 %v842
        %911 = vmatprep.subr.bf16.mxu0 0
        %912 = vmatpush2.bf16.msra.mxu0 %v841
        %913 = vmatprep.mubr.bf16.mxu0 %v642
        %914 = vmatmul.mubr.bf16.gmra.mxu0 %v641
        %v915 = vpop.f32.mrf.mxu0
        %v916 = vadd.f32 0.0, %v915
        %v917 = vpop.f32.mrf.mxu0
        %v918 = vpop.f32.mrf.mxu0
        %v919 = vadd.f32 0.0, %v918
        %v920 = vpop.f32.mrf.mxu0
        %921 = vmatprep.mubr.bf16.mxu0 %v645
        %922 = vmatmul.mubr.bf16.gmra.mxu0 %v644
        %v923 = vpop.f32.mrf.mxu0
        %v924 = vadd.f32 0.0, %v923
        %v925 = vpop.f32.mrf.mxu0
        %v926 = vpop.f32.mrf.mxu0
        %v927 = vadd.f32 0.0, %v926
        %v928 = vpop.f32.mrf.mxu0
        %929 = vmatprep.mubr.bf16.mxu0 %v648
        %930 = vmatmul.mubr.bf16.gmra.mxu0 %v647
        %v931 = vpop.f32.mrf.mxu0
        %v932 = vadd.f32 0.0, %v931
        %v933 = vpop.f32.mrf.mxu0
        %v934 = vpop.f32.mrf.mxu0
        %v935 = vadd.f32 0.0, %v934
        %v936 = vpop.f32.mrf.mxu0
        %937 = vmatprep.mubr.bf16.mxu0 %v651
        %938 = vmatmul.mubr.bf16.gmra.mxu0 %v650
        %v939 = vpop.f32.mrf.mxu0
        %v940 = vadd.f32 0.0, %v939
        %v941 = vpop.f32.mrf.mxu0
        %v942 = vpop.f32.mrf.mxu0
        %v943 = vadd.f32 0.0, %v942
        %v944 = vpop.f32.mrf.mxu0
        %945 = vmatprep.mubr.bf16.mxu0 %v654
        %946 = vmatmul.mubr.bf16.gmra.mxu0 %v653
        %v947 = vpop.f32.mrf.mxu0
        %v948 = vadd.f32 0.0, %v947
        %v949 = vpop.f32.mrf.mxu0
        %v950 = vpop.f32.mrf.mxu0
        %v951 = vadd.f32 0.0, %v950
        %v952 = vpop.f32.mrf.mxu0
        %953 = vmatprep.mubr.bf16.mxu0 %v657
        %954 = vmatmul.mubr.bf16.gmra.mxu0 %v656
        %v955 = vpop.f32.mrf.mxu0
        %v956 = vadd.f32 0.0, %v955
        %v957 = vpop.f32.mrf.mxu0
        %v958 = vpop.f32.mrf.mxu0
        %v959 = vadd.f32 0.0, %v958
        %v960 = vpop.f32.mrf.mxu0
        %961 = vmatprep.mubr.bf16.mxu0 %v660
        %962 = vmatmul.mubr.bf16.gmra.mxu0 %v659
        %v963 = vpop.f32.mrf.mxu0
        %v964 = vadd.f32 0.0, %v963
        %v965 = vpop.f32.mrf.mxu0
        %v966 = vpop.f32.mrf.mxu0
        %v967 = vadd.f32 0.0, %v966
        %v968 = vpop.f32.mrf.mxu0
        %969 = vmatprep.mubr.bf16.mxu0 %v663
        %970 = vmatmul.mubr.bf16.gmra.mxu0 %v662
        %v971 = vpop.f32.mrf.mxu0
        %v972 = vadd.f32 0.0, %v971
        %v973 = vpop.f32.mrf.mxu0
        %v974 = vpop.f32.mrf.mxu0
        %v975 = vadd.f32 0.0, %v974
        %v976 = vpop.f32.mrf.mxu0
        %977 = vmatprep.mubr.bf16.mxu0 %v666
        %978 = vmatmul.mubr.bf16.gmra.mxu0 %v665
        %v979 = vpop.f32.mrf.mxu0
        %v980 = vadd.f32 0.0, %v979
        %v981 = vpop.f32.mrf.mxu0
        %v982 = vpop.f32.mrf.mxu0
        %v983 = vadd.f32 0.0, %v982
        %v984 = vpop.f32.mrf.mxu0
        %985 = vmatprep.mubr.bf16.mxu0 %v669
        %986 = vmatmul.mubr.bf16.gmra.mxu0 %v668
        %v987 = vpop.f32.mrf.mxu0
        %v988 = vadd.f32 0.0, %v987
        %v989 = vpop.f32.mrf.mxu0
        %v990 = vpop.f32.mrf.mxu0
        %v991 = vadd.f32 0.0, %v990
        %v992 = vpop.f32.mrf.mxu0
        %993 = vmatprep.mubr.bf16.mxu0 %v672
        %994 = vmatmul.mubr.bf16.gmra.mxu0 %v671
        %v995 = vpop.f32.mrf.mxu0
        %v996 = vadd.f32 0.0, %v995
        %v997 = vpop.f32.mrf.mxu0
        %v998 = vpop.f32.mrf.mxu0
        %v999 = vadd.f32 0.0, %v998
        %v1000 = vpop.f32.mrf.mxu0
        %1001 = vmatprep.mubr.bf16.mxu0 %v675
        %1002 = vmatmul.mubr.bf16.gmra.mxu0 %v674
        %v1003 = vpop.f32.mrf.mxu0
        %v1004 = vadd.f32 0.0, %v1003
        %v1005 = vpop.f32.mrf.mxu0
        %v1006 = vpop.f32.mrf.mxu0
        %v1007 = vadd.f32 0.0, %v1006
        %v1008 = vpop.f32.mrf.mxu0
        %1009 = vmatprep.mubr.bf16.mxu0 %v678
        %1010 = vmatmul.mubr.bf16.gmra.mxu0 %v677
        %v1011 = vpop.f32.mrf.mxu0
        %v1012 = vadd.f32 0.0, %v1011
        %v1013 = vpop.f32.mrf.mxu0
        %v1014 = vpop.f32.mrf.mxu0
        %v1015 = vadd.f32 0.0, %v1014
        %v1016 = vpop.f32.mrf.mxu0
        %1017 = vmatprep.mubr.bf16.mxu0 %v681
        %1018 = vmatmul.mubr.bf16.gmra.mxu0 %v680
        %v1019 = vpop.f32.mrf.mxu0
        %v1020 = vadd.f32 0.0, %v1019
        %v1021 = vpop.f32.mrf.mxu0
        %v1022 = vpop.f32.mrf.mxu0
        %v1023 = vadd.f32 0.0, %v1022
        %v1024 = vpop.f32.mrf.mxu0
        %1025 = vmatprep.mubr.bf16.mxu0 %v684
        %1026 = vmatmul.mubr.bf16.gmra.mxu0 %v683
        %v1027 = vpop.f32.mrf.mxu0
        %v1028 = vadd.f32 0.0, %v1027
        %v1029 = vpop.f32.mrf.mxu0
        %v1030 = vpop.f32.mrf.mxu0
        %v1031 = vadd.f32 0.0, %v1030
        %v1032 = vpop.f32.mrf.mxu0
        %1033 = vmatprep.mubr.bf16.mxu0 %v687
        %1034 = vmatmul.mubr.bf16.gmra.mxu0 %v686
        %v1035 = vpop.f32.mrf.mxu0
        %v1036 = vadd.f32 0.0, %v1035
        %v1037 = vpop.f32.mrf.mxu0
        %v1038 = vpop.f32.mrf.mxu0
        %v1039 = vadd.f32 0.0, %v1038
        %v1040 = vpop.f32.mrf.mxu0
        %1041 = vdwg.mxu0
        %1042 = vmatprep.subr.bf16.mxu0 0
        %1043 = vmatpush1.bf16.msra.mxu0 %v856
        %1044 = vmatprep.subr.bf16.mxu0 0
        %1045 = vmatpush1.bf16.msra.mxu0 %v855
        %1046 = vmatprep.subr.bf16.mxu0 0
        %1047 = vmatpush1.bf16.msra.mxu0 %v854
        %1048 = vmatprep.subr.bf16.mxu0 0
        %1049 = vmatpush1.bf16.msra.mxu0 %v853
        %1050 = vmatprep.subr.bf16.mxu0 0
        %1051 = vmatpush1.bf16.msra.mxu0 %v852
        %1052 = vmatprep.subr.bf16.mxu0 0
        %1053 = vmatpush1.bf16.msra.mxu0 %v851
        %1054 = vmatprep.subr.bf16.mxu0 0
        %1055 = vmatpush1.bf16.msra.mxu0 %v850
        %1056 = vmatprep.subr.bf16.mxu0 0
        %1057 = vmatpush1.bf16.msra.mxu0 %v849
        %1058 = vmatprep.subr.bf16.mxu0 0
        %1059 = vmatpush2.bf16.msra.mxu0 0
        %1060 = vmatprep.subr.bf16.mxu0 0
        %1061 = vmatpush2.bf16.msra.mxu0 0
        %1062 = vmatprep.subr.bf16.mxu0 0
        %1063 = vmatpush2.bf16.msra.mxu0 0
        %1064 = vmatprep.subr.bf16.mxu0 0
        %1065 = vmatpush2.bf16.msra.mxu0 0
        %1066 = vmatprep.subr.bf16.mxu0 0
        %1067 = vmatpush2.bf16.msra.mxu0 0
        %1068 = vmatprep.subr.bf16.mxu0 0
        %1069 = vmatpush2.bf16.msra.mxu0 0
        %1070 = vmatprep.subr.bf16.mxu0 0
        %1071 = vmatpush2.bf16.msra.mxu0 0
        %1072 = vmatprep.subr.bf16.mxu0 0
        %1073 = vmatpush2.bf16.msra.mxu0 0
        %1074 = vmatprep.mubr.bf16.mxu0 0
        %1075 = vmatmul.mubr.bf16.gmra.mxu0 %v643
        %v1076 = vpop.f32.mrf.mxu0
        %v1077 = vadd.f32 %v916, %v1076
        %v1078 = vpop.f32.mrf.mxu0
        %v1079 = vpop.f32.mrf.mxu0
        %v1080 = vadd.f32 %v919, %v1079
        %v1081 = vpop.f32.mrf.mxu0
        %1082 = vmatprep.mubr.bf16.mxu0 0
        %1083 = vmatmul.mubr.bf16.gmra.mxu0 %v646
        %v1084 = vpop.f32.mrf.mxu0
        %v1085 = vadd.f32 %v924, %v1084
        %v1086 = vpop.f32.mrf.mxu0
        %v1087 = vpop.f32.mrf.mxu0
        %v1088 = vadd.f32 %v927, %v1087
        %v1089 = vpop.f32.mrf.mxu0
        %1090 = vmatprep.mubr.bf16.mxu0 0
        %1091 = vmatmul.mubr.bf16.gmra.mxu0 %v649
        %v1092 = vpop.f32.mrf.mxu0
        %v1093 = vadd.f32 %v932, %v1092
        %v1094 = vpop.f32.mrf.mxu0
        %v1095 = vpop.f32.mrf.mxu0
        %v1096 = vadd.f32 %v935, %v1095
        %v1097 = vpop.f32.mrf.mxu0
        %1098 = vmatprep.mubr.bf16.mxu0 0
        %1099 = vmatmul.mubr.bf16.gmra.mxu0 %v652
        %v1100 = vpop.f32.mrf.mxu0
        %v1101 = vadd.f32 %v940, %v1100
        %v1102 = vpop.f32.mrf.mxu0
        %v1103 = vpop.f32.mrf.mxu0
        %v1104 = vadd.f32 %v943, %v1103
        %v1105 = vpop.f32.mrf.mxu0
        %1106 = vmatprep.mubr.bf16.mxu0 0
        %1107 = vmatmul.mubr.bf16.gmra.mxu0 %v655
        %v1108 = vpop.f32.mrf.mxu0
        %v1109 = vadd.f32 %v948, %v1108
        %v1110 = vpop.f32.mrf.mxu0
        %v1111 = vpop.f32.mrf.mxu0
        %v1112 = vadd.f32 %v951, %v1111
        %v1113 = vpop.f32.mrf.mxu0
        %1114 = vmatprep.mubr.bf16.mxu0 0
        %1115 = vmatmul.mubr.bf16.gmra.mxu0 %v658
        %v1116 = vpop.f32.mrf.mxu0
        %v1117 = vadd.f32 %v956, %v1116
        %v1118 = vpop.f32.mrf.mxu0
        %v1119 = vpop.f32.mrf.mxu0
        %v1120 = vadd.f32 %v959, %v1119
        %v1121 = vpop.f32.mrf.mxu0
        %1122 = vmatprep.mubr.bf16.mxu0 0
        %1123 = vmatmul.mubr.bf16.gmra.mxu0 %v661
        %v1124 = vpop.f32.mrf.mxu0
        %v1125 = vadd.f32 %v964, %v1124
        %v1126 = vpop.f32.mrf.mxu0
        %v1127 = vpop.f32.mrf.mxu0
        %v1128 = vadd.f32 %v967, %v1127
        %v1129 = vpop.f32.mrf.mxu0
        %1130 = vmatprep.mubr.bf16.mxu0 0
        %1131 = vmatmul.mubr.bf16.gmra.mxu0 %v664
        %v1132 = vpop.f32.mrf.mxu0
        %v1133 = vadd.f32 %v972, %v1132
        %v1134 = vpop.f32.mrf.mxu0
        %v1135 = vpop.f32.mrf.mxu0
        %v1136 = vadd.f32 %v975, %v1135
        %v1137 = vpop.f32.mrf.mxu0
        %1138 = vmatprep.mubr.bf16.mxu0 0
        %1139 = vmatmul.mubr.bf16.gmra.mxu0 %v667
        %v1140 = vpop.f32.mrf.mxu0
        %v1141 = vadd.f32 %v980, %v1140
        %v1142 = vpop.f32.mrf.mxu0
        %v1143 = vpop.f32.mrf.mxu0
        %v1144 = vadd.f32 %v983, %v1143
        %v1145 = vpop.f32.mrf.mxu0
        %1146 = vmatprep.mubr.bf16.mxu0 0
        %1147 = vmatmul.mubr.bf16.gmra.mxu0 %v670
        %v1148 = vpop.f32.mrf.mxu0
        %v1149 = vadd.f32 %v988, %v1148
        %v1150 = vpop.f32.mrf.mxu0
        %v1151 = vpop.f32.mrf.mxu0
        %v1152 = vadd.f32 %v991, %v1151
        %v1153 = vpop.f32.mrf.mxu0
        %1154 = vmatprep.mubr.bf16.mxu0 0
        %1155 = vmatmul.mubr.bf16.gmra.mxu0 %v673
        %v1156 = vpop.f32.mrf.mxu0
        %v1157 = vadd.f32 %v996, %v1156
        %v1158 = vpop.f32.mrf.mxu0
        %v1159 = vpop.f32.mrf.mxu0
        %v1160 = vadd.f32 %v999, %v1159
        %v1161 = vpop.f32.mrf.mxu0
        %1162 = vmatprep.mubr.bf16.mxu0 0
        %1163 = vmatmul.mubr.bf16.gmra.mxu0 %v676
        %v1164 = vpop.f32.mrf.mxu0
        %v1165 = vadd.f32 %v1004, %v1164
        %v1166 = vpop.f32.mrf.mxu0
        %v1167 = vpop.f32.mrf.mxu0
        %v1168 = vadd.f32 %v1007, %v1167
        %v1169 = vpop.f32.mrf.mxu0
        %1170 = vmatprep.mubr.bf16.mxu0 0
        %1171 = vmatmul.mubr.bf16.gmra.mxu0 %v679
        %v1172 = vpop.f32.mrf.mxu0
        %v1173 = vadd.f32 %v1012, %v1172
        %v1174 = vpop.f32.mrf.mxu0
        %v1175 = vpop.f32.mrf.mxu0
        %v1176 = vadd.f32 %v1015, %v1175
        %v1177 = vpop.f32.mrf.mxu0
        %1178 = vmatprep.mubr.bf16.mxu0 0
        %1179 = vmatmul.mubr.bf16.gmra.mxu0 %v682
        %v1180 = vpop.f32.mrf.mxu0
        %v1181 = vadd.f32 %v1020, %v1180
        %v1182 = vpop.f32.mrf.mxu0
        %v1183 = vpop.f32.mrf.mxu0
        %v1184 = vadd.f32 %v1023, %v1183
        %v1185 = vpop.f32.mrf.mxu0
        %1186 = vmatprep.mubr.bf16.mxu0 0
        %1187 = vmatmul.mubr.bf16.gmra.mxu0 %v685
        %v1188 = vpop.f32.mrf.mxu0
        %v1189 = vadd.f32 %v1028, %v1188
        %v1190 = vpop.f32.mrf.mxu0
        %v1191 = vpop.f32.mrf.mxu0
        %v1192 = vadd.f32 %v1031, %v1191
        %v1193 = vpop.f32.mrf.mxu0
        %1194 = vmatprep.mubr.bf16.mxu0 0
        %1195 = vmatmul.mubr.bf16.gmra.mxu0 %v688
        %v1196 = vpop.f32.mrf.mxu0
        %v1197 = vadd.f32 %v1036, %v1196
        %v1198 = vpop.f32.mrf.mxu0
        %v1199 = vpop.f32.mrf.mxu0
        %v1200 = vadd.f32 %v1039, %v1199
        %v1201 = vpop.f32.mrf.mxu0
        %1202 = vdwg.mxu0
        %v1203 = vadd.f32 %v337, %v1077
        %v1204 = vadd.f32 %v338, %v1080
        %v1205 = vadd.f32 %v339, %v1085
        %v1206 = vadd.f32 %v340, %v1088
        %v1207 = vadd.f32 %v341, %v1093
        %v1208 = vadd.f32 %v342, %v1096
        %v1209 = vadd.f32 %v343, %v1101
        %v1210 = vadd.f32 %v344, %v1104
        %v1211 = vadd.f32 %v345, %v1109
        %v1212 = vadd.f32 %v346, %v1112
        %v1213 = vadd.f32 %v347, %v1117
        %v1214 = vadd.f32 %v348, %v1120
        %v1215 = vadd.f32 %v349, %v1125
        %v1216 = vadd.f32 %v350, %v1128
        %v1217 = vadd.f32 %v351, %v1133
        %v1218 = vadd.f32 %v352, %v1136
        %v1219 = vadd.f32 %v353, %v1141
        %v1220 = vadd.f32 %v354, %v1144
        %v1221 = vadd.f32 %v355, %v1149
        %v1222 = vadd.f32 %v356, %v1152
        %v1223 = vadd.f32 %v357, %v1157
        %v1224 = vadd.f32 %v358, %v1160
        %v1225 = vadd.f32 %v359, %v1165
        %v1226 = vadd.f32 %v360, %v1168
        %v1227 = vadd.f32 %v361, %v1173
        %v1228 = vadd.f32 %v362, %v1176
        %v1229 = vadd.f32 %v363, %v1181
        %v1230 = vadd.f32 %v364, %v1184
        %v1231 = vadd.f32 %v365, %v1189
        %v1232 = vadd.f32 %v366, %v1192
        %v1233 = vadd.f32 %v367, %v1197
        %v1234 = vadd.f32 %v368, %v1200
        %1235 = vst [vmem:[#allocation2] sm:$0xff] %v1203
        %1236 = vst [vmem:[#allocation2 + $0x8] sm:$0xff] %v1204
        %1237 = vst [vmem:[#allocation2 + $0x10] sm:$0xff] %v1205
        %1238 = vst [vmem:[#allocation2 + $0x18] sm:$0xff] %v1206
        %1239 = vst [vmem:[#allocation2 + $0x20] sm:$0xff] %v1207
        %1240 = vst [vmem:[#allocation2 + $0x28] sm:$0xff] %v1208
        %1241 = vst [vmem:[#allocation2 + $0x30] sm:$0xff] %v1209
        %1242 = vst [vmem:[#allocation2 + $0x38] sm:$0xff] %v1210
        %1243 = vst [vmem:[#allocation2 + $0x40] sm:$0xff] %v1211
        %1244 = vst [vmem:[#allocation2 + $0x48] sm:$0xff] %v1212
        %1245 = vst [vmem:[#allocation2 + $0x50] sm:$0xff] %v1213
        %1246 = vst [vmem:[#allocation2 + $0x58] sm:$0xff] %v1214
        %1247 = vst [vmem:[#allocation2 + $0x60] sm:$0xff] %v1215
        %1248 = vst [vmem:[#allocation2 + $0x68] sm:$0xff] %v1216
        %1249 = vst [vmem:[#allocation2 + $0x70] sm:$0xff] %v1217
        %1250 = vst [vmem:[#allocation2 + $0x78] sm:$0xff] %v1218
        %1251 = vst [vmem:[#allocation2 + $0x80] sm:$0xff] %v1219
        %1252 = vst [vmem:[#allocation2 + $0x88] sm:$0xff] %v1220
        %1253 = vst [vmem:[#allocation2 + $0x90] sm:$0xff] %v1221
        %1254 = vst [vmem:[#allocation2 + $0x98] sm:$0xff] %v1222
        %1255 = vst [vmem:[#allocation2 + $0xa0] sm:$0xff] %v1223
        %1256 = vst [vmem:[#allocation2 + $0xa8] sm:$0xff] %v1224
        %1257 = vst [vmem:[#allocation2 + $0xb0] sm:$0xff] %v1225
        %1258 = vst [vmem:[#allocation2 + $0xb8] sm:$0xff] %v1226
        %1259 = vst [vmem:[#allocation2 + $0xc0] sm:$0xff] %v1227
        %1260 = vst [vmem:[#allocation2 + $0xc8] sm:$0xff] %v1228
        %1261 = vst [vmem:[#allocation2 + $0xd0] sm:$0xff] %v1229
        %1262 = vst [vmem:[#allocation2 + $0xd8] sm:$0xff] %v1230
        %1263 = vst [vmem:[#allocation2 + $0xe0] sm:$0xff] %v1231
        %1264 = vst [vmem:[#allocation2 + $0xe8] sm:$0xff] %v1232
        %1265 = vst [vmem:[#allocation2 + $0xf0] sm:$0xff] %v1233
        %1266 = vst [vmem:[#allocation2 + $0xf8] sm:$0xff] %v1234
        // Predicated region
        $region41: #{forward.3} parent=35 // pred_check
          %p1267 = pneg %p301
        $region42: #{forward.3} parent=35 // pred_check_branch
          %1269 = sbr.rel (%p1267) target = $region44
        $region43: #{forward.3} parent=35 // pred_region
          %v1270 = vld [vmem:[#allocation2] sm:$0xff]
          %v1271 = vld [vmem:[#allocation2 + $0x8] sm:$0xff]
          %v1272 = vld [vmem:[#allocation2 + $0x10] sm:$0xff]
          %v1273 = vld [vmem:[#allocation2 + $0x18] sm:$0xff]
          %v1274 = vld [vmem:[#allocation2 + $0x20] sm:$0xff]
          %v1275 = vld [vmem:[#allocation2 + $0x28] sm:$0xff]
          %v1276 = vld [vmem:[#allocation2 + $0x30] sm:$0xff]
          %v1277 = vld [vmem:[#allocation2 + $0x38] sm:$0xff]
          %v1278 = vld [vmem:[#allocation2 + $0x40] sm:$0xff]
          %v1279 = vld [vmem:[#allocation2 + $0x48] sm:$0xff]
          %v1280 = vld [vmem:[#allocation2 + $0x50] sm:$0xff]
          %v1281 = vld [vmem:[#allocation2 + $0x58] sm:$0xff]
          %v1282 = vld [vmem:[#allocation2 + $0x60] sm:$0xff]
          %v1283 = vld [vmem:[#allocation2 + $0x68] sm:$0xff]
          %v1284 = vld [vmem:[#allocation2 + $0x70] sm:$0xff]
          %v1285 = vld [vmem:[#allocation2 + $0x78] sm:$0xff]
          %v1286 = vld [vmem:[#allocation2 + $0x80] sm:$0xff]
          %v1287 = vld [vmem:[#allocation2 + $0x88] sm:$0xff]
          %v1288 = vld [vmem:[#allocation2 + $0x90] sm:$0xff]
          %v1289 = vld [vmem:[#allocation2 + $0x98] sm:$0xff]
          %v1290 = vld [vmem:[#allocation2 + $0xa0] sm:$0xff]
          %v1291 = vld [vmem:[#allocation2 + $0xa8] sm:$0xff]
          %v1292 = vld [vmem:[#allocation2 + $0xb0] sm:$0xff]
          %v1293 = vld [vmem:[#allocation2 + $0xb8] sm:$0xff]
          %v1294 = vld [vmem:[#allocation2 + $0xc0] sm:$0xff]
          %v1295 = vld [vmem:[#allocation2 + $0xc8] sm:$0xff]
          %v1296 = vld [vmem:[#allocation2 + $0xd0] sm:$0xff]
          %v1297 = vld [vmem:[#allocation2 + $0xd8] sm:$0xff]
          %v1298 = vld [vmem:[#allocation2 + $0xe0] sm:$0xff]
          %v1299 = vld [vmem:[#allocation2 + $0xe8] sm:$0xff]
          %v1300 = vld [vmem:[#allocation2 + $0xf0] sm:$0xff]
          %v1301 = vld [vmem:[#allocation2 + $0xf8] sm:$0xff]
          %v1302 = vld [vmem:[%s295] sm:$0x1]
          %v1304 = vlaneseq
          %v1305 = vshrl.u32 %v1304, 7
          %v1306 = vsub.s32 0, %v1305
          %v1307 = vrot.slane %v1302, %v1306
          %v1309 = vmul.f32 %v1270, %v1307
          %v1310 = vmul.f32 %v1271, %v1307
          %v1311 = vmul.f32 %v1272, %v1307
          %v1312 = vmul.f32 %v1273, %v1307
          %v1313 = vmul.f32 %v1274, %v1307
          %v1314 = vmul.f32 %v1275, %v1307
          %v1315 = vmul.f32 %v1276, %v1307
          %v1316 = vmul.f32 %v1277, %v1307
          %v1317 = vmul.f32 %v1278, %v1307
          %v1318 = vmul.f32 %v1279, %v1307
          %v1319 = vmul.f32 %v1280, %v1307
          %v1320 = vmul.f32 %v1281, %v1307
          %v1321 = vmul.f32 %v1282, %v1307
          %v1322 = vmul.f32 %v1283, %v1307
          %v1323 = vmul.f32 %v1284, %v1307
          %v1324 = vmul.f32 %v1285, %v1307
          %v1325 = vmul.f32 %v1286, %v1307
          %v1326 = vmul.f32 %v1287, %v1307
          %v1327 = vmul.f32 %v1288, %v1307
          %v1328 = vmul.f32 %v1289, %v1307
          %v1329 = vmul.f32 %v1290, %v1307
          %v1330 = vmul.f32 %v1291, %v1307
          %v1331 = vmul.f32 %v1292, %v1307
          %v1332 = vmul.f32 %v1293, %v1307
          %v1333 = vmul.f32 %v1294, %v1307
          %v1334 = vmul.f32 %v1295, %v1307
          %v1335 = vmul.f32 %v1296, %v1307
          %v1336 = vmul.f32 %v1297, %v1307
          %v1337 = vmul.f32 %v1298, %v1307
          %v1338 = vmul.f32 %v1299, %v1307
          %v1339 = vmul.f32 %v1300, %v1307
          %v1340 = vmul.f32 %v1301, %v1307
          %v1341 = vld [vmem:[%s298] sm:$0x1]
          %v1343 = vlaneseq
          %v1344 = vshrl.u32 %v1343, 7
          %v1345 = vsub.s32 0, %v1344
          %v1346 = vrot.slane %v1341, %v1345
          %v1348 = vadd.f32 %v1309, %v1346
          %v1349 = vadd.f32 %v1310, %v1346
          %v1350 = vadd.f32 %v1311, %v1346
          %v1351 = vadd.f32 %v1312, %v1346
          %v1352 = vadd.f32 %v1313, %v1346
          %v1353 = vadd.f32 %v1314, %v1346
          %v1354 = vadd.f32 %v1315, %v1346
          %v1355 = vadd.f32 %v1316, %v1346
          %v1356 = vadd.f32 %v1317, %v1346
          %v1357 = vadd.f32 %v1318, %v1346
          %v1358 = vadd.f32 %v1319, %v1346
          %v1359 = vadd.f32 %v1320, %v1346
          %v1360 = vadd.f32 %v1321, %v1346
          %v1361 = vadd.f32 %v1322, %v1346
          %v1362 = vadd.f32 %v1323, %v1346
          %v1363 = vadd.f32 %v1324, %v1346
          %v1364 = vadd.f32 %v1325, %v1346
          %v1365 = vadd.f32 %v1326, %v1346
          %v1366 = vadd.f32 %v1327, %v1346
          %v1367 = vadd.f32 %v1328, %v1346
          %v1368 = vadd.f32 %v1329, %v1346
          %v1369 = vadd.f32 %v1330, %v1346
          %v1370 = vadd.f32 %v1331, %v1346
          %v1371 = vadd.f32 %v1332, %v1346
          %v1372 = vadd.f32 %v1333, %v1346
          %v1373 = vadd.f32 %v1334, %v1346
          %v1374 = vadd.f32 %v1335, %v1346
          %v1375 = vadd.f32 %v1336, %v1346
          %v1376 = vadd.f32 %v1337, %v1346
          %v1377 = vadd.f32 %v1338, %v1346
          %v1378 = vadd.f32 %v1339, %v1346
          %v1379 = vadd.f32 %v1340, %v1346
          %v1380 = vmax.f32 %v1348, 0.0
          %v1381 = vmax.f32 %v1349, 0.0
          %v1382 = vmax.f32 %v1350, 0.0
          %v1383 = vmax.f32 %v1351, 0.0
          %v1384 = vmax.f32 %v1352, 0.0
          %v1385 = vmax.f32 %v1353, 0.0
          %v1386 = vmax.f32 %v1354, 0.0
          %v1387 = vmax.f32 %v1355, 0.0
          %v1388 = vmax.f32 %v1356, 0.0
          %v1389 = vmax.f32 %v1357, 0.0
          %v1390 = vmax.f32 %v1358, 0.0
          %v1391 = vmax.f32 %v1359, 0.0
          %v1392 = vmax.f32 %v1360, 0.0
          %v1393 = vmax.f32 %v1361, 0.0
          %v1394 = vmax.f32 %v1362, 0.0
          %v1395 = vmax.f32 %v1363, 0.0
          %v1396 = vmax.f32 %v1364, 0.0
          %v1397 = vmax.f32 %v1365, 0.0
          %v1398 = vmax.f32 %v1366, 0.0
          %v1399 = vmax.f32 %v1367, 0.0
          %v1400 = vmax.f32 %v1368, 0.0
          %v1401 = vmax.f32 %v1369, 0.0
          %v1402 = vmax.f32 %v1370, 0.0
          %v1403 = vmax.f32 %v1371, 0.0
          %v1404 = vmax.f32 %v1372, 0.0
          %v1405 = vmax.f32 %v1373, 0.0
          %v1406 = vmax.f32 %v1374, 0.0
          %v1407 = vmax.f32 %v1375, 0.0
          %v1408 = vmax.f32 %v1376, 0.0
          %v1409 = vmax.f32 %v1377, 0.0
          %v1410 = vmax.f32 %v1378, 0.0
          %v1411 = vmax.f32 %v1379, 0.0
          %1412 = vst [vmem:[%s271] sm:$0xff] %v1380
          %1413 = vst [vmem:[%s271 + $0x8] sm:$0xff] %v1381
          %1414 = vst [vmem:[%s271 + $0x10] sm:$0xff] %v1382
          %1415 = vst [vmem:[%s271 + $0x18] sm:$0xff] %v1383
          %1416 = vst [vmem:[%s271 + $0x20] sm:$0xff] %v1384
          %1417 = vst [vmem:[%s271 + $0x28] sm:$0xff] %v1385
          %1418 = vst [vmem:[%s271 + $0x30] sm:$0xff] %v1386
          %1419 = vst [vmem:[%s271 + $0x38] sm:$0xff] %v1387
          %1420 = vst [vmem:[%s271 + $0x40] sm:$0xff] %v1388
          %1421 = vst [vmem:[%s271 + $0x48] sm:$0xff] %v1389
          %1422 = vst [vmem:[%s271 + $0x50] sm:$0xff] %v1390
          %1423 = vst [vmem:[%s271 + $0x58] sm:$0xff] %v1391
          %1424 = vst [vmem:[%s271 + $0x60] sm:$0xff] %v1392
          %1425 = vst [vmem:[%s271 + $0x68] sm:$0xff] %v1393
          %1426 = vst [vmem:[%s271 + $0x70] sm:$0xff] %v1394
          %1427 = vst [vmem:[%s271 + $0x78] sm:$0xff] %v1395
          %1428 = vst [vmem:[%s271 + $0x80] sm:$0xff] %v1396
          %1429 = vst [vmem:[%s271 + $0x88] sm:$0xff] %v1397
          %1430 = vst [vmem:[%s271 + $0x90] sm:$0xff] %v1398
          %1431 = vst [vmem:[%s271 + $0x98] sm:$0xff] %v1399
          %1432 = vst [vmem:[%s271 + $0xa0] sm:$0xff] %v1400
          %1433 = vst [vmem:[%s271 + $0xa8] sm:$0xff] %v1401
          %1434 = vst [vmem:[%s271 + $0xb0] sm:$0xff] %v1402
          %1435 = vst [vmem:[%s271 + $0xb8] sm:$0xff] %v1403
          %1436 = vst [vmem:[%s271 + $0xc0] sm:$0xff] %v1404
          %1437 = vst [vmem:[%s271 + $0xc8] sm:$0xff] %v1405
          %1438 = vst [vmem:[%s271 + $0xd0] sm:$0xff] %v1406
          %1439 = vst [vmem:[%s271 + $0xd8] sm:$0xff] %v1407
          %1440 = vst [vmem:[%s271 + $0xe0] sm:$0xff] %v1408
          %1441 = vst [vmem:[%s271 + $0xe8] sm:$0xff] %v1409
          %1442 = vst [vmem:[%s271 + $0xf0] sm:$0xff] %v1410
          %1443 = vst [vmem:[%s271 + $0xf8] sm:$0xff] %v1411
        $region44: #{forward.3} parent=35 // pred_fallthru
          _
        %s1444 = sand.u32 %s155, 1
        %s1445 = scalar_lea.sflag [#allocation4], %s1444
        %s1446 = sand.u32 %s155, 1
        %s1447 = smul.addr %s1446, 256
        %s1448 = scalar_lea.vmem [#allocation3], %s1447
        // Predicated region
        $region45: #{forward.3} parent=35 // pred_check
          %p1449 = pneg %p165
        $region46: #{forward.3} parent=35 // pred_check_branch
          %1451 = sbr.rel (%p1449) target = $region48
        $region47: #{forward.3} parent=35 // pred_region
          %s1452 = smul.u32 32, %s23
          %s1454 = ssub.s32 4096, 4096
          %1455 = vsyncadd %s1445, %s1454
          %s1456 = sadd.s32 %s24, %s1452
          %s1457 = smul.addr %s1456, 128
          %s1458 = scalar_lea.hbm %s4, %s1457
          %s1459 = sshll.u32 %s1448, 4
          %s1460 = int_to_ptr.vmem [resolvable:$true] %s1459
          %1465 = dma.vmem_to_hbm [thread:$0]  %s1460, 4096, %s1458, %s1445, 128, 128, 8
        $region48: #{forward.3} parent=35 // pred_fallthru
          _
      $region36: #{forward.3} parent=5 // pred_fallthru
        _
      %p1466 = scmp.le.s32.totalorder 2, %s13
      // Predicated region
      $region49: #{forward.3} parent=5 // pred_check
        %p1467 = pneg %p1466
      $region50: #{forward.3} parent=5 // pred_check_branch
        %1469 = sbr.rel (%p1467) target = $region52
      $region51: #{forward.3} parent=5 // pred_region
        %s1470 = ssub.s32 %s13, 2
        // Predicated region
        $region53: #{forward.3} parent=51 // pred_check
          %p1471 = pneg %p171
        $region54: #{forward.3} parent=51 // pred_check_branch
          %1473 = sbr.rel (%p1471) target = $region56
        $region55: #{forward.3} parent=51 // pred_region
          %s1474 = sand.u32 %s156, 1
          %s1475 = scalar_lea.sflag [#allocation4], %s1474
          %s1476 = sand.u32 %s156, 1
          %s1477 = smul.addr %s1476, 256
          %s1478 = scalar_lea.vmem [#allocation3], %s1477
          %1479 = dma.done %s1475, 4096
        $region56: #{forward.3} parent=51 // pred_fallthru
          _
      $region52: #{forward.3} parent=5 // pred_fallthru
        _
    $region6: #{forward.3} parent=1 // loop_footer
      %s17 = sadd.s32 1, %s13
    $region7: #{forward.3} parent=1 // loop_footer_branch
      %12 = sbr.rel target = $region3
    $region8: #{forward.3} parent=1 // loop_exit
      _
    %1480 = vsyncpa [#allocation4], 1
    %s1481 = scalar_lea.sflag [#allocation4], 1
    %1482 = vsyncpa %s1481, 1

</llo_original>
